<compile_context>
chip_gen: v7x
topology: tpu7x:2x2x1
jax: 0.10.0
libtpu: 0.0.40
codegen_flags: <defaults>
</compile_context>

<pallas_src>
import functools
import math

import jax
import jax.numpy as jnp
from jax.experimental import pallas as pl
from jax.experimental.pallas import tpu as pltpu

_VMEM_LIMIT = 48 * 1024 * 1024   # fits v5e/v6e/v7x scoped VMEM budgets
_MAX_ROW_TILE = 512              # row tile for linear/MLP/MoE slabs
_MAX_Q_TILE = 512                # q-token tile for attention


def _row_tile(m, max_tile):
    return m if m <= max_tile else max_tile


def _softplus(x):
    # numerically-stable softplus (elementwise ops only)
    return jnp.maximum(x, 0.0) + jnp.log1p(jnp.exp(-jnp.abs(x)))


# --------------------------------------------------------------------------
# Fused attention (+pe prologue, +residual, +LayerNorm) kernel
# --------------------------------------------------------------------------

def _attn_ln_kernel(qx_ref, qpe_ref, kx_ref, kpe_ref, vx_ref,
                    wq_ref, bq_ref, wk_ref, bk_ref, wv_ref, bv_ref,
                    wo_ref, bo_ref, g_ref, lnb_ref, o_ref,
                    *, num_heads, scale, add_residual, eps):
    qx = qx_ref[0].astype(jnp.float32)                         # (TQ, E)
    q_in = qx + qpe_ref[0].astype(jnp.float32)                 # q = tokens + pe
    k_in = kx_ref[0].astype(jnp.float32) + kpe_ref[0].astype(jnp.float32)
    v_in = vx_ref[0].astype(jnp.float32)

    q = jnp.dot(q_in, wq_ref[...], preferred_element_type=jnp.float32) + bq_ref[...]
    k = jnp.dot(k_in, wk_ref[...], preferred_element_type=jnp.float32) + bk_ref[...]
    v = jnp.dot(v_in, wv_ref[...], preferred_element_type=jnp.float32) + bv_ref[...]
    wo = wo_ref[...]

    dh = q.shape[-1] // num_heads
    out = None
    for h in range(num_heads):                                 # unrolled, static
        sl = slice(h * dh, (h + 1) * dh)
        # q_h @ k_h^T via dot_general — no materialized transpose
        s = jax.lax.dot_general(q[:, sl], k[:, sl], (((1,), (1,)), ((), ())),
                                preferred_element_type=jnp.float32) * scale
        s = s - jnp.max(s, axis=-1, keepdims=True)
        p = jnp.exp(s)
        p = p * pl.reciprocal(jnp.sum(p, axis=-1, keepdims=True), approx=True)
        o_h = jnp.dot(p, v[:, sl], preferred_element_type=jnp.float32)      # (TQ, dh)
        # out_proj(concat_h o_h) == sum_h o_h @ wo[h*dh:(h+1)*dh, :]
        contrib = jnp.dot(o_h, wo[sl, :], preferred_element_type=jnp.float32)
        out = contrib if out is None else out + contrib
    out = out + bo_ref[...]
    if add_residual:
        out = out + qx

    mu = jnp.mean(out, axis=-1, keepdims=True)
    var = jnp.mean((out - mu) ** 2, axis=-1, keepdims=True)
    y = (out - mu) * jax.lax.rsqrt(var + eps)
    o_ref[0] = (y * g_ref[...] + lnb_ref[...]).astype(o_ref.dtype)


def fused_attention(p, q_tok, q_pe, k_tok, k_pe, v_tok, ln_g, ln_b,
                    *, num_heads, add_residual, eps=1e-5):
    """LayerNorm(residual + out_proj(MHA(q_tok+q_pe, k_tok+k_pe, v_tok)))."""
    b, nq, e = q_tok.shape
    nk = k_tok.shape[1]
    internal = p['wq'].shape[1]
    dh = internal // num_heads
    tq = _row_tile(nq, _MAX_Q_TILE)
    grid = (b, pl.cdiv(nq, tq))

    tok_q = lambda bi, qi: (bi, qi, 0)
    tok_k = lambda bi, qi: (bi, 0, 0)
    rep = lambda bi, qi: (0, 0)

    kernel = functools.partial(
        _attn_ln_kernel, num_heads=num_heads, scale=1.0 / math.sqrt(dh),
        add_residual=add_residual, eps=eps)

    # TODO(synk): for very large nk (real SAM image token counts) K/V should be
    # tiled over nk with an online-softmax inner loop instead of full residency.
    return pl.pallas_call(
        kernel,
        grid=grid,
        in_specs=[
            pl.BlockSpec((1, tq, e), tok_q),          # q tokens
            pl.BlockSpec((1, tq, e), tok_q),          # q pe
            pl.BlockSpec((1, nk, e), tok_k),          # k tokens
            pl.BlockSpec((1, nk, e), tok_k),          # k pe
            pl.BlockSpec((1, nk, e), tok_k),          # v tokens
            pl.BlockSpec((e, internal), rep),         # wq
            pl.BlockSpec((1, internal), rep),         # bq
            pl.BlockSpec((e, internal), rep),         # wk
            pl.BlockSpec((1, internal), rep),         # bk
            pl.BlockSpec((e, internal), rep),         # wv
            pl.BlockSpec((1, internal), rep),         # bv
            pl.BlockSpec((internal, e), rep),         # wo
            pl.BlockSpec((1, e), rep),                # bo
            pl.BlockSpec((1, e), rep),                # ln gamma
            pl.BlockSpec((1, e), rep),                # ln beta
        ],
        out_specs=pl.BlockSpec((1, tq, e), tok_q),
        out_shape=jax.ShapeDtypeStruct((b, nq, e), q_tok.dtype),
        compiler_params=pltpu.CompilerParams(
            dimension_semantics=("parallel", "parallel"),
            vmem_limit_bytes=_VMEM_LIMIT),
    )(q_tok, q_pe, k_tok, k_pe, v_tok,
      p['wq'], p['bq'].reshape(1, -1), p['wk'], p['bk'].reshape(1, -1),
      p['wv'], p['bv'].reshape(1, -1), p['wo'], p['bo'].reshape(1, -1),
      ln_g.reshape(1, -1), ln_b.reshape(1, -1))


# --------------------------------------------------------------------------
# Fused MLP (+residual, +LayerNorm) kernel
# --------------------------------------------------------------------------

def _mlp_res_ln_kernel(x_ref, w1_ref, b1_ref, w2_ref, b2_ref, g_ref, lnb_ref,
                       o_ref, *, eps):
    x = x_ref[...].astype(jnp.float32)
    h = jnp.maximum(
        jnp.dot(x, w1_ref[...], preferred_element_type=jnp.float32) + b1_ref[...],
        0.0)
    y = jnp.dot(h, w2_ref[...], preferred_element_type=jnp.float32) + b2_ref[...]
    out = x + y                                               # residual
    mu = jnp.mean(out, axis=-1, keepdims=True)
    var = jnp.mean((out - mu) ** 2, axis=-1, keepdims=True)
    yn = (out - mu) * jax.lax.rsqrt(var + eps)
    o_ref[...] = (yn * g_ref[...] + lnb_ref[...]).astype(o_ref.dtype)


def fused_mlp(x, w1, b1, w2, b2, g, bln, eps=1e-5):
    """LayerNorm(x + lin2(relu(lin1(x)))), row-tiled."""
    shp = x.shape
    x2 = x.reshape(-1, shp[-1])
    m, e = x2.shape
    hid = w1.shape[1]
    tm = _row_tile(m, _MAX_ROW_TILE)
    rep = lambda i: (0, 0)
    out = pl.pallas_call(
        functools.partial(_mlp_res_ln_kernel, eps=eps),
        grid=(pl.cdiv(m, tm),),
        in_specs=[
            pl.BlockSpec((tm, e), lambda i: (i, 0)),
            pl.BlockSpec((e, hid), rep),
            pl.BlockSpec((1, hid), rep),
            pl.BlockSpec((hid, e), rep),
            pl.BlockSpec((1, e), rep),
            pl.BlockSpec((1, e), rep),
            pl.BlockSpec((1, e), rep),
        ],
        out_specs=pl.BlockSpec((tm, e), lambda i: (i, 0)),
        out_shape=jax.ShapeDtypeStruct((m, e), x.dtype),
        compiler_params=pltpu.CompilerParams(
            dimension_semantics=("parallel",),
            vmem_limit_bytes=_VMEM_LIMIT),
    )(x2, w1, b1.reshape(1, -1), w2, b2.reshape(1, -1),
      g.reshape(1, -1), bln.reshape(1, -1))
    return out.reshape(shp)


# --------------------------------------------------------------------------
# Sparse MoE
# --------------------------------------------------------------------------

def _router_kernel(idx_ref, x_ref, rw_ref, rb_ref, nw_ref, nb_ref, noise_ref,
                   o_ref):
    del idx_ref  # consumed by the index_maps
    x = x_ref[0].astype(jnp.float32)
    logits = jnp.dot(x, rw_ref[0], preferred_element_type=jnp.float32) + rb_ref[0]
    nlog = jnp.dot(x, nw_ref[0], preferred_element_type=jnp.float32) + nb_ref[0]
    noisy = logits + noise_ref[0].astype(jnp.float32) * _softplus(nlog)
    o_ref[0] = noisy.astype(o_ref.dtype)


def _moe_router(p, x, moe_idx, noise):
    b, n, e = x.shape
    num_experts = p['router_w'].shape[2]
    tn = _row_tile(n, _MAX_ROW_TILE)
    grid = (b, pl.cdiv(n, tn))
    gs = pltpu.PrefetchScalarGridSpec(
        num_scalar_prefetch=1,
        grid=grid,
        in_specs=[
            pl.BlockSpec((1, tn, e), lambda bi, i, idx: (bi, i, 0)),
            pl.BlockSpec((1, e, num_experts), lambda bi, i, idx: (idx[bi], 0, 0)),
            pl.BlockSpec((1, 1, num_experts), lambda bi, i, idx: (idx[bi], 0, 0)),
            pl.BlockSpec((1, e, num_experts), lambda bi, i, idx: (idx[bi], 0, 0)),
            pl.BlockSpec((1, 1, num_experts), lambda bi, i, idx: (idx[bi], 0, 0)),
            pl.BlockSpec((1, tn, num_experts), lambda bi, i, idx: (bi, i, 0)),
        ],
        out_specs=pl.BlockSpec((1, tn, num_experts), lambda bi, i, idx: (bi, i, 0)),
    )
    return pl.pallas_call(
        _router_kernel,
        grid_spec=gs,
        out_shape=jax.ShapeDtypeStruct((b, n, num_experts), x.dtype),
        compiler_params=pltpu.CompilerParams(
            dimension_semantics=("arbitrary", "arbitrary"),
            vmem_limit_bytes=_VMEM_LIMIT),
    )(moe_idx, x, p['router_w'], p['router_b'], p['noise_w'], p['noise_b'], noise)


def _moe_expert_kernel(x_ref, g_ref, w1_ref, b1_ref, w2_ref, b2_ref, o_ref,
                       acc_ref):
    e_idx = pl.program_id(1)
    x = x_ref[...].astype(jnp.float32)

    @pl.when(e_idx == 0)
    def _():
        acc_ref[...] = x       # fused residual: keys + sum_e gate_e * expert_e(keys)

    h = jnp.maximum(
        jnp.dot(x, w1_ref[0], preferred_element_type=jnp.float32) + b1_ref[0],
        0.0)
    y = jnp.dot(h, w2_ref[0], preferred_element_type=jnp.float32) + b2_ref[0]
    acc_ref[...] += y * g_ref[0]                       # gating is 0 outside top-k

    @pl.when(e_idx == pl.num_programs(1) - 1)
    def _():
        o_ref[...] = acc_ref[...].astype(o_ref.dtype)


def _moe_experts(p, x, gating):
    """Returns x + sum_e gating_e * expert_e(x) in a single pass (no per-expert
    HBM intermediates).  gating is exactly zero for non-top-k experts, so this
    equals the PyTorch masked scatter/add."""
    # TODO(synk): dense over all tokens per expert (top_k/num_experts extra
    # FLOPs); a grouped-matmul scalar-prefetch layout would process only the
    # routed tokens.
    b, n, e = x.shape
    num_experts = p['experts_w1'].shape[0]
    hidden = p['experts_w1'].shape[2]
    m = b * n
    x2 = x.reshape(m, e)
    g2 = gating.transpose(2, 0, 1).reshape(num_experts, m, 1)
    tm = _row_tile(m, _MAX_ROW_TILE)
    grid = (pl.cdiv(m, tm), num_experts)
    out = pl.pallas_call(
        _moe_expert_kernel,
        grid=grid,
        in_specs=[
            pl.BlockSpec((tm, e), lambda i, ee: (i, 0)),
            pl.BlockSpec((1, tm, 1), lambda i, ee: (ee, i, 0)),
            pl.BlockSpec((1, e, hidden), lambda i, ee: (ee, 0, 0)),
            pl.BlockSpec((1, 1, hidden), lambda i, ee: (ee, 0, 0)),
            pl.BlockSpec((1, hidden, e), lambda i, ee: (ee, 0, 0)),
            pl.BlockSpec((1, 1, e), lambda i, ee: (ee, 0, 0)),
        ],
        out_specs=pl.BlockSpec((tm, e), lambda i, ee: (i, 0)),
        out_shape=jax.ShapeDtypeStruct((m, e), x.dtype),
        scratch_shapes=[pltpu.VMEM((tm, e), jnp.float32)],
        compiler_params=pltpu.CompilerParams(
            dimension_semantics=("parallel", "arbitrary"),
            vmem_limit_bytes=_VMEM_LIMIT),
    )(x2, g2, p['experts_w1'], p['experts_b1'], p['experts_w2'], p['experts_b2'])
    return out.reshape(b, n, e)


def sparse_moe(p, x, moe_idx, noise_key, top_k):
    """SparseMoE.forward fused with the outer `keys = keys + moe(keys)` add."""
    b, n, _ = x.shape
    num_experts = p['experts_w1'].shape[0]
    noise = jax.random.normal(noise_key, (b, n, num_experts), x.dtype)
    noisy = _moe_router(p, x, moe_idx, noise)            # noisy router logits
    # top-k / sparse softmax routing on tiny (B, N, num_experts) tensors: JAX glue
    _, top_idx = jax.lax.top_k(noisy, top_k)
    sel = jnp.any(top_idx[..., None] == jnp.arange(num_experts), axis=-2)
    sparse_logits = jnp.where(sel, noisy, -jnp.inf)
    gating = jax.nn.softmax(sparse_logits, axis=-1)      # exactly 0 outside top-k
    # TODO(synk): Expert contains nn.Dropout(0.1); modeled as eval-mode identity.
    return _moe_experts(p, x, gating)


# --------------------------------------------------------------------------
# TwoWayTransformer forward
# --------------------------------------------------------------------------

def two_way_transformer(params, image_embedding, image_pe, point_embedding,
                        moe_idx, noise_key):
    bs, c, h, w, d = image_embedding.shape
    n_img = h * w * d
    image_embedding = image_embedding.reshape(bs, c, n_img).transpose(0, 2, 1)
    if image_pe is None:
        image_pe = jnp.zeros_like(image_embedding)
    else:
        image_pe = image_pe.reshape(bs, c, n_img).transpose(0, 2, 1)

    queries = point_embedding
    keys = image_embedding
    heads = params['num_heads']
    zero_q_pe = jnp.zeros_like(point_embedding)

    for i, lp in enumerate(params['layers']):
        if i == 0:   # skip_first_layer_pe: no pe, no residual
            queries = fused_attention(lp['self_attn'], queries, zero_q_pe,
                                      queries, zero_q_pe, queries,
                                      lp['norm1_g'], lp['norm1_b'],
                                      num_heads=heads, add_residual=False)
        else:
            queries = fused_attention(lp['self_attn'], queries, point_embedding,
                                      queries, point_embedding, queries,
                                      lp['norm1_g'], lp['norm1_b'],
                                      num_heads=heads, add_residual=True)

        # cross attention: tokens -> image
        queries = fused_attention(lp['cross_t2i'], queries, point_embedding,
                                  keys, image_pe, keys,
                                  lp['norm2_g'], lp['norm2_b'],
                                  num_heads=heads, add_residual=True)

        # MLP block on queries
        queries = fused_mlp(queries, lp['mlp_w1'], lp['mlp_b1'],
                            lp['mlp_w2'], lp['mlp_b2'],
                            lp['norm3_g'], lp['norm3_b'])

        # cross attention: image -> tokens  (q = keys+pe, k = queries+pe, v = queries)
        keys = fused_attention(lp['cross_i2t'], keys, image_pe,
                               queries, point_embedding, queries,
                               lp['norm4_g'], lp['norm4_b'],
                               num_heads=heads, add_residual=True)

    # final token -> image attention
    queries = fused_attention(params['final_attn'], queries, point_embedding,
                              keys, image_pe, keys,
                              params['norm_final_g'], params['norm_final_b'],
                              num_heads=heads, add_residual=True)

    if moe_idx is not None:
        keys = sparse_moe(params['moe'], keys, moe_idx, noise_key,
                          params['top_k'])   # includes the +keys residual

    keys = keys.transpose(0, 2, 1).reshape(bs, c, h, w, d)
    return queries, keys


# --------------------------------------------------------------------------
# Parameter init (deterministic, synthetic, PyTorch-like fan-in uniform)
# --------------------------------------------------------------------------

def _init_linear(key, fan_in, fan_out):
    kw, kb = jax.random.split(key)
    bound = 1.0 / math.sqrt(fan_in)
    w = jax.random.uniform(kw, (fan_in, fan_out), jnp.float32, -bound, bound)
    b = jax.random.uniform(kb, (fan_out,), jnp.float32, -bound, bound)
    return w, b


def _init_attention(key, embed, internal):
    ks = jax.random.split(key, 4)
    wq, bq = _init_linear(ks[0], embed, internal)
    wk, bk = _init_linear(ks[1], embed, internal)
    wv, bv = _init_linear(ks[2], embed, internal)
    wo, bo = _init_linear(ks[3], internal, embed)
    return dict(wq=wq, bq=bq, wk=wk, bk=bk, wv=wv, bv=bv, wo=wo, bo=bo)


def _init_block(key, embed, mlp_dim, dr):
    ks = jax.random.split(key, 5)
    w1, b1 = _init_linear(ks[2], embed, mlp_dim)
    w2, b2 = _init_linear(ks[3], mlp_dim, embed)
    ones = jnp.ones((embed,), jnp.float32)
    zeros = jnp.zeros((embed,), jnp.float32)
    return dict(
        self_attn=_init_attention(ks[0], embed, embed),
        cross_t2i=_init_attention(ks[1], embed, embed // dr),
        mlp_w1=w1, mlp_b1=b1, mlp_w2=w2, mlp_b2=b2,
        cross_i2t=_init_attention(ks[4], embed, embed // dr),
        norm1_g=ones, norm1_b=zeros, norm2_g=ones, norm2_b=zeros,
        norm3_g=ones, norm3_b=zeros, norm4_g=ones, norm4_b=zeros,
    )


def init_params(key, embed, heads, mlp_dim, dr=2, num_experts=4, top_k=2):
    depth = 2  # TwoWayTransformer.__init__ hard-codes depth = 2
    keys = jax.random.split(key, depth + 2)
    layers = [_init_block(keys[i], embed, mlp_dim, dr) for i in range(depth)]
    final_attn = _init_attention(keys[depth], embed, embed // dr)

    kmoe = jax.random.split(keys[depth + 1], 3 * num_experts)
    router_w, router_b, noise_w, noise_b = [], [], [], []
    ew1, eb1, ew2, eb2 = [], [], [], []
    for r in range(num_experts):
        w, b = _init_linear(kmoe[2 * r], embed, num_experts)
        router_w.append(w); router_b.append(b.reshape(1, -1))
        w, b = _init_linear(kmoe[2 * r + 1], embed, num_experts)
        noise_w.append(w); noise_b.append(b.reshape(1, -1))
    for e in range(num_experts):
        ke1, ke2 = jax.random.split(kmoe[2 * num_experts + e])
        w1, b1 = _init_linear(ke1, embed, 4 * embed)
        w2, b2 = _init_linear(ke2, 4 * embed, embed)
        ew1.append(w1); eb1.append(b1.reshape(1, -1))
        ew2.append(w2); eb2.append(b2.reshape(1, -1))

    return dict(
        num_heads=heads,
        top_k=top_k,
        layers=layers,
        final_attn=final_attn,
        norm_final_g=jnp.ones((embed,), jnp.float32),
        norm_final_b=jnp.zeros((embed,), jnp.float32),
        moe=dict(router_w=jnp.stack(router_w), router_b=jnp.stack(router_b),
                 noise_w=jnp.stack(noise_w), noise_b=jnp.stack(noise_b),
                 experts_w1=jnp.stack(ew1), experts_b1=jnp.stack(eb1),
                 experts_w2=jnp.stack(ew2), experts_b2=jnp.stack(eb2)),
    )


# --------------------------------------------------------------------------
# main
# --------------------------------------------------------------------------

if __name__ == "__main__":
    key = jax.random.PRNGKey(0)
    embed, heads, mlp_dim = 32, 2, 64
    B, Np = 2, 8
    H, W, D = 4, 4, 2

    kp, ki, kpe, kpt, kn = jax.random.split(key, 5)
    params = init_params(kp, embed, heads, mlp_dim, dr=2, num_experts=4, top_k=2)

    image_embedding = jax.random.normal(ki, (B, embed, H, W, D), jnp.float32)
    image_pe = jax.random.normal(kpe, (B, embed, H, W, D), jnp.float32)
    point_embedding = jax.random.normal(kpt, (B, Np, embed), jnp.float32)
    moe_idx = jnp.array([0, 1], dtype=jnp.int32)   # per-sample router index

    queries, keys_out = two_way_transformer(
        params, image_embedding, image_pe, point_embedding, moe_idx, kn)
    jax.block_until_ready((queries, keys_out))

    assert queries.shape == (B, Np, embed)
    assert keys_out.shape == (B, embed, H, W, D)
    assert jnp.all(jnp.isfinite(queries)) and jnp.all(jnp.isfinite(keys_out))
    print("KERNEL_OK")
</pallas_src>

<mosaic_0001>
module attributes {stable_mosaic.version = 11 : i64} {
  func.func @_attn_ln_kernel(%arg0: i32, %arg1: i32, %arg2: memref<1x8x32xf32, #tpu.memory_space<vmem>>, %arg3: memref<1x8x32xf32, #tpu.memory_space<vmem>>, %arg4: memref<1x8x32xf32, #tpu.memory_space<vmem>>, %arg5: memref<1x8x32xf32, #tpu.memory_space<vmem>>, %arg6: memref<1x8x32xf32, #tpu.memory_space<vmem>>, %arg7: memref<32x32xf32, #tpu.memory_space<vmem>>, %arg8: memref<1x32xf32, #tpu.memory_space<vmem>>, %arg9: memref<32x32xf32, #tpu.memory_space<vmem>>, %arg10: memref<1x32xf32, #tpu.memory_space<vmem>>, %arg11: memref<32x32xf32, #tpu.memory_space<vmem>>, %arg12: memref<1x32xf32, #tpu.memory_space<vmem>>, %arg13: memref<32x32xf32, #tpu.memory_space<vmem>>, %arg14: memref<1x32xf32, #tpu.memory_space<vmem>>, %arg15: memref<1x32xf32, #tpu.memory_space<vmem>>, %arg16: memref<1x32xf32, #tpu.memory_space<vmem>>, %arg17: memref<1x8x32xf32, #tpu.memory_space<vmem>>) attributes {dimension_semantics = [#tpu.dimension_semantics<parallel>, #tpu.dimension_semantics<parallel>], iteration_bounds = array<i64: 2, 1>, scalar_prefetch = 0 : i64, scratch_operands = 0 : i64, tpu.core_type = #tpu.core_type<tc>, window_params = [{transform_indices = @transform_0, window_bounds = array<i64: 1, 8, 32>}, {transform_indices = @transform_1, window_bounds = array<i64: 1, 8, 32>}, {transform_indices = @transform_2, window_bounds = array<i64: 1, 8, 32>}, {transform_indices = @transform_3, window_bounds = array<i64: 1, 8, 32>}, {transform_indices = @transform_4, window_bounds = array<i64: 1, 8, 32>}, {pipeline_mode = #tpu.pipeline_mode<synchronous>, transform_indices = @transform_5, window_bounds = array<i64: 32, 32>}, {pipeline_mode = #tpu.pipeline_mode<synchronous>, transform_indices = @transform_6, window_bounds = array<i64: 1, 32>}, {pipeline_mode = #tpu.pipeline_mode<synchronous>, transform_indices = @transform_7, window_bounds = array<i64: 32, 32>}, {pipeline_mode = #tpu.pipeline_mode<synchronous>, transform_indices = @transform_8, window_bounds = array<i64: 1, 32>}, {pipeline_mode = #tpu.pipeline_mode<synchronous>, transform_indices = @transform_9, window_bounds = array<i64: 32, 32>}, {pipeline_mode = #tpu.pipeline_mode<synchronous>, transform_indices = @transform_10, window_bounds = array<i64: 1, 32>}, {pipeline_mode = #tpu.pipeline_mode<synchronous>, transform_indices = @transform_11, window_bounds = array<i64: 32, 32>}, {pipeline_mode = #tpu.pipeline_mode<synchronous>, transform_indices = @transform_12, window_bounds = array<i64: 1, 32>}, {pipeline_mode = #tpu.pipeline_mode<synchronous>, transform_indices = @transform_13, window_bounds = array<i64: 1, 32>}, {pipeline_mode = #tpu.pipeline_mode<synchronous>, transform_indices = @transform_14, window_bounds = array<i64: 1, 32>}, {transform_indices = @transform_15, window_bounds = array<i64: 1, 8, 32>}]} {
    %c0 = arith.constant 0 : index
    %c0_0 = arith.constant 0 : index
    %c0_1 = arith.constant 0 : index
    %0 = vector.load %arg2[%c0, %c0_0, %c0_1] : memref<1x8x32xf32, #tpu.memory_space<vmem>>, vector<1x8x32xf32>
    %1 = vector.shape_cast %0 : vector<1x8x32xf32> to vector<8x32xf32>
    %c0_2 = arith.constant 0 : index
    %c0_3 = arith.constant 0 : index
    %c0_4 = arith.constant 0 : index
    %2 = vector.load %arg3[%c0_2, %c0_3, %c0_4] : memref<1x8x32xf32, #tpu.memory_space<vmem>>, vector<1x8x32xf32>
    %3 = vector.shape_cast %2 : vector<1x8x32xf32> to vector<8x32xf32>
    %4 = arith.addf %1, %3 : vector<8x32xf32>
    %c0_5 = arith.constant 0 : index
    %c0_6 = arith.constant 0 : index
    %c0_7 = arith.constant 0 : index
    %5 = vector.load %arg4[%c0_5, %c0_6, %c0_7] : memref<1x8x32xf32, #tpu.memory_space<vmem>>, vector<1x8x32xf32>
    %6 = vector.shape_cast %5 : vector<1x8x32xf32> to vector<8x32xf32>
    %c0_8 = arith.constant 0 : index
    %c0_9 = arith.constant 0 : index
    %c0_10 = arith.constant 0 : index
    %7 = vector.load %arg5[%c0_8, %c0_9, %c0_10] : memref<1x8x32xf32, #tpu.memory_space<vmem>>, vector<1x8x32xf32>
    %8 = vector.shape_cast %7 : vector<1x8x32xf32> to vector<8x32xf32>
    %9 = arith.addf %6, %8 : vector<8x32xf32>
    %c0_11 = arith.constant 0 : index
    %c0_12 = arith.constant 0 : index
    %c0_13 = arith.constant 0 : index
    %10 = vector.load %arg6[%c0_11, %c0_12, %c0_13] : memref<1x8x32xf32, #tpu.memory_space<vmem>>, vector<1x8x32xf32>
    %11 = vector.shape_cast %10 : vector<1x8x32xf32> to vector<8x32xf32>
    %c0_14 = arith.constant 0 : index
    %c0_15 = arith.constant 0 : index
    %12 = vector.load %arg7[%c0_14, %c0_15] : memref<32x32xf32, #tpu.memory_space<vmem>>, vector<32x32xf32>
    %cst = arith.constant dense<0.000000e+00> : vector<8x32xf32>
    %13 = tpu.matmul %4, %12, %cst {dimension_numbers = #tpu.dot_dimension_numbers<[1], [0], [0], [1], [0, 0, 1, 1], [], []>} : vector<8x32xf32>, vector<32x32xf32>, vector<8x32xf32> -> vector<8x32xf32>
    %c0_16 = arith.constant 0 : index
    %c0_17 = arith.constant 0 : index
    %14 = vector.load %arg8[%c0_16, %c0_17] : memref<1x32xf32, #tpu.memory_space<vmem>>, vector<1x32xf32>
    %15 = vector.broadcast %14 : vector<1x32xf32> to vector<8x32xf32>
    %16 = arith.addf %13, %15 : vector<8x32xf32>
    %c0_18 = arith.constant 0 : index
    %c0_19 = arith.constant 0 : index
    %17 = vector.load %arg9[%c0_18, %c0_19] : memref<32x32xf32, #tpu.memory_space<vmem>>, vector<32x32xf32>
    %cst_20 = arith.constant dense<0.000000e+00> : vector<8x32xf32>
    %18 = tpu.matmul %9, %17, %cst_20 {dimension_numbers = #tpu.dot_dimension_numbers<[1], [0], [0], [1], [0, 0, 1, 1], [], []>} : vector<8x32xf32>, vector<32x32xf32>, vector<8x32xf32> -> vector<8x32xf32>
    %c0_21 = arith.constant 0 : index
    %c0_22 = arith.constant 0 : index
    %19 = vector.load %arg10[%c0_21, %c0_22] : memref<1x32xf32, #tpu.memory_space<vmem>>, vector<1x32xf32>
    %20 = vector.broadcast %19 : vector<1x32xf32> to vector<8x32xf32>
    %21 = arith.addf %18, %20 : vector<8x32xf32>
    %c0_23 = arith.constant 0 : index
    %c0_24 = arith.constant 0 : index
    %22 = vector.load %arg11[%c0_23, %c0_24] : memref<32x32xf32, #tpu.memory_space<vmem>>, vector<32x32xf32>
    %cst_25 = arith.constant dense<0.000000e+00> : vector<8x32xf32>
    %23 = tpu.matmul %11, %22, %cst_25 {dimension_numbers = #tpu.dot_dimension_numbers<[1], [0], [0], [1], [0, 0, 1, 1], [], []>} : vector<8x32xf32>, vector<32x32xf32>, vector<8x32xf32> -> vector<8x32xf32>
    %c0_26 = arith.constant 0 : index
    %c0_27 = arith.constant 0 : index
    %24 = vector.load %arg12[%c0_26, %c0_27] : memref<1x32xf32, #tpu.memory_space<vmem>>, vector<1x32xf32>
    %25 = vector.broadcast %24 : vector<1x32xf32> to vector<8x32xf32>
    %26 = arith.addf %23, %25 : vector<8x32xf32>
    %c0_28 = arith.constant 0 : index
    %c0_29 = arith.constant 0 : index
    %27 = vector.load %arg13[%c0_28, %c0_29] : memref<32x32xf32, #tpu.memory_space<vmem>>, vector<32x32xf32>
    %28 = vector.extract_strided_slice %16 {offsets = [0, 0], sizes = [8, 16], strides = [1, 1]} : vector<8x32xf32> to vector<8x16xf32>
    %29 = vector.extract_strided_slice %21 {offsets = [0, 0], sizes = [8, 16], strides = [1, 1]} : vector<8x32xf32> to vector<8x16xf32>
    %cst_30 = arith.constant dense<0.000000e+00> : vector<8x8xf32>
    %30 = tpu.matmul %28, %29, %cst_30 {dimension_numbers = #tpu.dot_dimension_numbers<[1], [1], [0], [0], [0, 0, 1, 0], [], []>} : vector<8x16xf32>, vector<8x16xf32>, vector<8x8xf32> -> vector<8x8xf32>
    %cst_31 = arith.constant 2.500000e-01 : f32
    %31 = vector.broadcast %cst_31 : f32 to vector<8x8xf32>
    %32 = arith.mulf %30, %31 : vector<8x8xf32>
    %cst_32 = arith.constant dense<0xFF800000> : vector<8xf32>
    %33 = vector.multi_reduction <maximumf>, %32, %cst_32 [1] : vector<8x8xf32> to vector<8xf32>
    %34 = vector.shape_cast %33 : vector<8xf32> to vector<8x1xf32>
    %35 = vector.broadcast %34 : vector<8x1xf32> to vector<8x8xf32>
    %36 = arith.subf %32, %35 : vector<8x8xf32>
    %37 = math.exp %36 : vector<8x8xf32>
    %cst_33 = arith.constant dense<0.000000e+00> : vector<8xf32>
    %38 = vector.multi_reduction <add>, %37, %cst_33 [1] : vector<8x8xf32> to vector<8xf32>
    %39 = vector.shape_cast %38 : vector<8xf32> to vector<8x1xf32>
    %40 = tpu.reciprocal %39 {approx = true} : vector<8x1xf32> -> vector<8x1xf32>
    %41 = vector.broadcast %40 : vector<8x1xf32> to vector<8x8xf32>
    %42 = arith.mulf %37, %41 : vector<8x8xf32>
    %43 = vector.extract_strided_slice %26 {offsets = [0, 0], sizes = [8, 16], strides = [1, 1]} : vector<8x32xf32> to vector<8x16xf32>
    %cst_34 = arith.constant dense<0.000000e+00> : vector<8x16xf32>
    %44 = tpu.matmul %42, %43, %cst_34 {dimension_numbers = #tpu.dot_dimension_numbers<[1], [0], [0], [1], [0, 0, 1, 1], [], []>} : vector<8x8xf32>, vector<8x16xf32>, vector<8x16xf32> -> vector<8x16xf32>
    %45 = vector.extract_strided_slice %27 {offsets = [0, 0], sizes = [16, 32], strides = [1, 1]} : vector<32x32xf32> to vector<16x32xf32>
    %cst_35 = arith.constant dense<0.000000e+00> : vector<8x32xf32>
    %46 = tpu.matmul %44, %45, %cst_35 {dimension_numbers = #tpu.dot_dimension_numbers<[1], [0], [0], [1], [0, 0, 1, 1], [], []>} : vector<8x16xf32>, vector<16x32xf32>, vector<8x32xf32> -> vector<8x32xf32>
    %47 = vector.extract_strided_slice %16 {offsets = [0, 16], sizes = [8, 16], strides = [1, 1]} : vector<8x32xf32> to vector<8x16xf32>
    %48 = vector.extract_strided_slice %21 {offsets = [0, 16], sizes = [8, 16], strides = [1, 1]} : vector<8x32xf32> to vector<8x16xf32>
    %cst_36 = arith.constant dense<0.000000e+00> : vector<8x8xf32>
    %49 = tpu.matmul %47, %48, %cst_36 {dimension_numbers = #tpu.dot_dimension_numbers<[1], [1], [0], [0], [0, 0, 1, 0], [], []>} : vector<8x16xf32>, vector<8x16xf32>, vector<8x8xf32> -> vector<8x8xf32>
    %cst_37 = arith.constant 2.500000e-01 : f32
    %50 = vector.broadcast %cst_37 : f32 to vector<8x8xf32>
    %51 = arith.mulf %49, %50 : vector<8x8xf32>
    %cst_38 = arith.constant dense<0xFF800000> : vector<8xf32>
    %52 = vector.multi_reduction <maximumf>, %51, %cst_38 [1] : vector<8x8xf32> to vector<8xf32>
    %53 = vector.shape_cast %52 : vector<8xf32> to vector<8x1xf32>
    %54 = vector.broadcast %53 : vector<8x1xf32> to vector<8x8xf32>
    %55 = arith.subf %51, %54 : vector<8x8xf32>
    %56 = math.exp %55 : vector<8x8xf32>
    %cst_39 = arith.constant dense<0.000000e+00> : vector<8xf32>
    %57 = vector.multi_reduction <add>, %56, %cst_39 [1] : vector<8x8xf32> to vector<8xf32>
    %58 = vector.shape_cast %57 : vector<8xf32> to vector<8x1xf32>
    %59 = tpu.reciprocal %58 {approx = true} : vector<8x1xf32> -> vector<8x1xf32>
    %60 = vector.broadcast %59 : vector<8x1xf32> to vector<8x8xf32>
    %61 = arith.mulf %56, %60 : vector<8x8xf32>
    %62 = vector.extract_strided_slice %26 {offsets = [0, 16], sizes = [8, 16], strides = [1, 1]} : vector<8x32xf32> to vector<8x16xf32>
    %cst_40 = arith.constant dense<0.000000e+00> : vector<8x16xf32>
    %63 = tpu.matmul %61, %62, %cst_40 {dimension_numbers = #tpu.dot_dimension_numbers<[1], [0], [0], [1], [0, 0, 1, 1], [], []>} : vector<8x8xf32>, vector<8x16xf32>, vector<8x16xf32> -> vector<8x16xf32>
    %64 = vector.extract_strided_slice %27 {offsets = [16, 0], sizes = [16, 32], strides = [1, 1]} : vector<32x32xf32> to vector<16x32xf32>
    %cst_41 = arith.constant dense<0.000000e+00> : vector<8x32xf32>
    %65 = tpu.matmul %63, %64, %cst_41 {dimension_numbers = #tpu.dot_dimension_numbers<[1], [0], [0], [1], [0, 0, 1, 1], [], []>} : vector<8x16xf32>, vector<16x32xf32>, vector<8x32xf32> -> vector<8x32xf32>
    %66 = arith.addf %46, %65 : vector<8x32xf32>
    %c0_42 = arith.constant 0 : index
    %c0_43 = arith.constant 0 : index
    %67 = vector.load %arg14[%c0_42, %c0_43] : memref<1x32xf32, #tpu.memory_space<vmem>>, vector<1x32xf32>
    %68 = vector.broadcast %67 : vector<1x32xf32> to vector<8x32xf32>
    %69 = arith.addf %66, %68 : vector<8x32xf32>
    %cst_44 = arith.constant dense<0.000000e+00> : vector<8xf32>
    %70 = vector.multi_reduction <add>, %69, %cst_44 [1] : vector<8x32xf32> to vector<8xf32>
    %71 = vector.shape_cast %70 : vector<8xf32> to vector<8x1xf32>
    %cst_45 = arith.constant 3.200000e+01 : f32
    %72 = vector.broadcast %cst_45 : f32 to vector<8x1xf32>
    %73 = arith.divf %71, %72 : vector<8x1xf32>
    %74 = vector.broadcast %73 : vector<8x1xf32> to vector<8x32xf32>
    %75 = arith.subf %69, %74 : vector<8x32xf32>
    %76 = arith.mulf %75, %75 : vector<8x32xf32>
    %cst_46 = arith.constant dense<0.000000e+00> : vector<8xf32>
    %77 = vector.multi_reduction <add>, %76, %cst_46 [1] : vector<8x32xf32> to vector<8xf32>
    %78 = vector.shape_cast %77 : vector<8xf32> to vector<8x1xf32>
    %cst_47 = arith.constant 3.200000e+01 : f32
    %79 = vector.broadcast %cst_47 : f32 to vector<8x1xf32>
    %80 = arith.divf %78, %79 : vector<8x1xf32>
    %81 = vector.broadcast %73 : vector<8x1xf32> to vector<8x32xf32>
    %82 = arith.subf %69, %81 : vector<8x32xf32>
    %cst_48 = arith.constant 9.99999974E-6 : f32
    %83 = vector.broadcast %cst_48 : f32 to vector<8x1xf32>
    %84 = arith.addf %80, %83 : vector<8x1xf32>
    %85 = math.rsqrt %84 : vector<8x1xf32>
    %86 = vector.broadcast %85 : vector<8x1xf32> to vector<8x32xf32>
    %87 = arith.mulf %82, %86 : vector<8x32xf32>
    %c0_49 = arith.constant 0 : index
    %c0_50 = arith.constant 0 : index
    %88 = vector.load %arg15[%c0_49, %c0_50] : memref<1x32xf32, #tpu.memory_space<vmem>>, vector<1x32xf32>
    %89 = vector.broadcast %88 : vector<1x32xf32> to vector<8x32xf32>
    %90 = arith.mulf %87, %89 : vector<8x32xf32>
    %c0_51 = arith.constant 0 : index
    %c0_52 = arith.constant 0 : index
    %91 = vector.load %arg16[%c0_51, %c0_52] : memref<1x32xf32, #tpu.memory_space<vmem>>, vector<1x32xf32>
    %92 = vector.broadcast %91 : vector<1x32xf32> to vector<8x32xf32>
    %93 = arith.addf %90, %92 : vector<8x32xf32>
    %c0_53 = arith.constant 0 : index
    %c0_54 = arith.constant 0 : index
    %c0_55 = arith.constant 0 : index
    %94 = vector.load %arg17[%c0_53, %c0_54, %c0_55] : memref<1x8x32xf32, #tpu.memory_space<vmem>>, vector<1x8x32xf32>
    %95 = vector.shape_cast %94 : vector<1x8x32xf32> to vector<8x32xf32>
    %96 = vector.shape_cast %93 : vector<8x32xf32> to vector<1x8x32xf32>
    tpu.vector_store %arg17[%c0_53, %c0_54, %c0_55], %96 {strides = array<i32>} : memref<1x8x32xf32, #tpu.memory_space<vmem>>, vector<1x8x32xf32>,
    return
  }
  func.func @transform_0(%arg0: i32, %arg1: i32) -> (i32, i32, i32) {
    %c0_i32 = arith.constant 0 : i32
    %c0_i32_0 = arith.constant 0 : i32
    return %arg0, %arg1, %c0_i32 : i32, i32, i32
  }
  func.func @transform_1(%arg0: i32, %arg1: i32) -> (i32, i32, i32) {
    %c0_i32 = arith.constant 0 : i32
    %c0_i32_0 = arith.constant 0 : i32
    return %arg0, %arg1, %c0_i32 : i32, i32, i32
  }
  func.func @transform_2(%arg0: i32, %arg1: i32) -> (i32, i32, i32) {
    %c0_i32 = arith.constant 0 : i32
    %c0_i32_0 = arith.constant 0 : i32
    %c0_i32_1 = arith.constant 0 : i32
    return %arg0, %c0_i32, %c0_i32_0 : i32, i32, i32
  }
  func.func @transform_3(%arg0: i32, %arg1: i32) -> (i32, i32, i32) {
    %c0_i32 = arith.constant 0 : i32
    %c0_i32_0 = arith.constant 0 : i32
    %c0_i32_1 = arith.constant 0 : i32
    return %arg0, %c0_i32, %c0_i32_0 : i32, i32, i32
  }
  func.func @transform_4(%arg0: i32, %arg1: i32) -> (i32, i32, i32) {
    %c0_i32 = arith.constant 0 : i32
    %c0_i32_0 = arith.constant 0 : i32
    %c0_i32_1 = arith.constant 0 : i32
    return %arg0, %c0_i32, %c0_i32_0 : i32, i32, i32
  }
  func.func @transform_5(%arg0: i32, %arg1: i32) -> (i32, i32) {
    %c0_i32 = arith.constant 0 : i32
    %c0_i32_0 = arith.constant 0 : i32
    %c0_i32_1 = arith.constant 0 : i32
    return %c0_i32, %c0_i32_0 : i32, i32
  }
  func.func @transform_6(%arg0: i32, %arg1: i32) -> (i32, i32) {
    %c0_i32 = arith.constant 0 : i32
    %c0_i32_0 = arith.constant 0 : i32
    %c0_i32_1 = arith.constant 0 : i32
    return %c0_i32, %c0_i32_0 : i32, i32
  }
  func.func @transform_7(%arg0: i32, %arg1: i32) -> (i32, i32) {
    %c0_i32 = arith.constant 0 : i32
    %c0_i32_0 = arith.constant 0 : i32
    %c0_i32_1 = arith.constant 0 : i32
    return %c0_i32, %c0_i32_0 : i32, i32
  }
  func.func @transform_8(%arg0: i32, %arg1: i32) -> (i32, i32) {
    %c0_i32 = arith.constant 0 : i32
    %c0_i32_0 = arith.constant 0 : i32
    %c0_i32_1 = arith.constant 0 : i32
    return %c0_i32, %c0_i32_0 : i32, i32
  }
  func.func @transform_9(%arg0: i32, %arg1: i32) -> (i32, i32) {
    %c0_i32 = arith.constant 0 : i32
    %c0_i32_0 = arith.constant 0 : i32
    %c0_i32_1 = arith.constant 0 : i32
    return %c0_i32, %c0_i32_0 : i32, i32
  }
  func.func @transform_10(%arg0: i32, %arg1: i32) -> (i32, i32) {
    %c0_i32 = arith.constant 0 : i32
    %c0_i32_0 = arith.constant 0 : i32
    %c0_i32_1 = arith.constant 0 : i32
    return %c0_i32, %c0_i32_0 : i32, i32
  }
  func.func @transform_11(%arg0: i32, %arg1: i32) -> (i32, i32) {
    %c0_i32 = arith.constant 0 : i32
    %c0_i32_0 = arith.constant 0 : i32
    %c0_i32_1 = arith.constant 0 : i32
    return %c0_i32, %c0_i32_0 : i32, i32
  }
  func.func @transform_12(%arg0: i32, %arg1: i32) -> (i32, i32) {
    %c0_i32 = arith.constant 0 : i32
    %c0_i32_0 = arith.constant 0 : i32
    %c0_i32_1 = arith.constant 0 : i32
    return %c0_i32, %c0_i32_0 : i32, i32
  }
  func.func @transform_13(%arg0: i32, %arg1: i32) -> (i32, i32) {
    %c0_i32 = arith.constant 0 : i32
    %c0_i32_0 = arith.constant 0 : i32
    %c0_i32_1 = arith.constant 0 : i32
    return %c0_i32, %c0_i32_0 : i32, i32
  }
  func.func @transform_14(%arg0: i32, %arg1: i32) -> (i32, i32) {
    %c0_i32 = arith.constant 0 : i32
    %c0_i32_0 = arith.constant 0 : i32
    %c0_i32_1 = arith.constant 0 : i32
    return %c0_i32, %c0_i32_0 : i32, i32
  }
  func.func @transform_15(%arg0: i32, %arg1: i32) -> (i32, i32, i32) {
    %c0_i32 = arith.constant 0 : i32
    %c0_i32_0 = arith.constant 0 : i32
    return %arg0, %arg1, %c0_i32 : i32, i32, i32
  }
}

</mosaic_0001>

<llo_original>
// kernel: tpu_custom_call.1
$region0: #{tpu_custom_call.1}
  #allocation0 [shape = 'u32[]', space=smem, size = 0x4, offset = 0x4, fixed_abs, tag = 'smem constant byte address 0x4 - core index']
  #allocation1 [shape = 'u32[144,128]{1,0:T(1,128)}', space=vmem, size = 0x12000, scoped, tag = 'internal scratch']
  %s0 = inlined_call_operand.hbm [shape: f32[2,8,32], index: 0, kind: input, shape index: {}]
  %s1 = inlined_call_operand.hbm [shape: f32[2,8,32], index: 1, kind: input, shape index: {}]
  %s2 = inlined_call_operand.hbm [shape: f32[2,8,32], index: 2, kind: input, shape index: {}]
  %s3 = inlined_call_operand.hbm [shape: f32[2,8,32], index: 3, kind: input, shape index: {}]
  %s4 = inlined_call_operand.hbm [shape: f32[2,8,32], index: 4, kind: input, shape index: {}]
  %s5 = inlined_call_operand.hbm [shape: f32[32,32], index: 5, kind: input, shape index: {}]
  %s6 = inlined_call_operand.vmem [shape: f32[1,32], index: 6, kind: input, shape index: {}]
  %s7 = inlined_call_operand.hbm [shape: f32[32,32], index: 7, kind: input, shape index: {}]
  %s8 = inlined_call_operand.vmem [shape: f32[1,32], index: 8, kind: input, shape index: {}]
  %s9 = inlined_call_operand.vmem [shape: f32[32,32], index: 9, kind: input, shape index: {}]
  %s10 = inlined_call_operand.vmem [shape: f32[1,32], index: 10, kind: input, shape index: {}]
  %s11 = inlined_call_operand.hbm [shape: f32[32,32], index: 11, kind: input, shape index: {}]
  %s12 = inlined_call_operand.vmem [shape: f32[1,32], index: 12, kind: input, shape index: {}]
  %s13 = inlined_call_operand.vmem [shape: f32[1,32], index: 13, kind: input, shape index: {}]
  %s14 = inlined_call_operand.vmem [shape: f32[1,32], index: 14, kind: input, shape index: {}]
  %s15 = inlined_call_operand.hbm [shape: f32[2,8,32], index: 15, kind: output, shape index: {}]
  %s16 = sld [smem:[#allocation0]]
  $region125: #{tpu_custom_call.1} parent=0
    _
  %s18 = ssub.s32 1, %s16
  %s19 = scalar_select 0, %s18, %s16
  $region1: #{tpu_custom_call.1} parent=0
    #allocation2 [shape = 'u8[8192]{0}', space=vmem, size = 0x2000, scoped, tag = 'input window, operand 0']
    #allocation3 [shape = 's32[2]{0}', space=sflag, size = 0x8, scoped, tag = 'scoped memory for tpu_custom_call.1']
    #allocation4 [shape = 's32[2]{0}', space=sflag, size = 0x8, scoped, tag = 'scoped memory for tpu_custom_call.1']
    #allocation5 [shape = 'u8[8192]{0}', space=vmem, size = 0x2000, scoped, tag = 'input window, operand 1']
    #allocation6 [shape = 's32[2]{0}', space=sflag, size = 0x8, scoped, tag = 'scoped memory for tpu_custom_call.1']
    #allocation7 [shape = 'u8[8192]{0}', space=vmem, size = 0x2000, scoped, tag = 'input window, operand 2']
    #allocation8 [shape = 'u8[8192]{0}', space=vmem, size = 0x2000, scoped, tag = 'input window, operand 3']
    #allocation9 [shape = 's32[2]{0}', space=sflag, size = 0x8, scoped, tag = 'scoped memory for tpu_custom_call.1']
    #allocation10 [shape = 'u8[8192]{0}', space=vmem, size = 0x2000, scoped, tag = 'input window, operand 4']
    #allocation11 [shape = 'u8[16384]{0}', space=vmem, size = 0x4000, scoped, tag = 'input window, operand 5, single buffered']
    #allocation12 [shape = 's32[1]{0}', space=sflag, size = 0x4, scoped, tag = 'scoped memory for tpu_custom_call.1']
    #allocation13 [shape = 'u8[16384]{0}', space=vmem, size = 0x4000, scoped, tag = 'input window, operand 7, single buffered']
    #allocation14 [shape = 'u8[16384]{0}', space=vmem, size = 0x4000, scoped, tag = 'input window, operand 11, single buffered']
    #allocation15 [shape = 's32[1]{0}', space=sflag, size = 0x4, scoped, tag = 'scoped memory for tpu_custom_call.1']
    #allocation16 [shape = 'u8[8192]{0}', space=vmem, size = 0x2000, scoped, tag = 'output window, operand 0']
    %20 = vsyncpa [#allocation3], 0
    %s21 = scalar_lea.sflag [#allocation3], 1
    %22 = vsyncpa %s21, 0
    %23 = vsyncpa [#allocation6], 0
    %s24 = scalar_lea.sflag [#allocation6], 1
    %25 = vsyncpa %s24, 0
    %26 = vsyncpa [#allocation9], 0
    %s27 = scalar_lea.sflag [#allocation9], 1
    %28 = vsyncpa %s27, 0
    %29 = vsyncpa [#allocation12], 0
    %30 = vsyncpa [#allocation15], 0
    %31 = vsyncpa [#allocation4], 0
    %s32 = scalar_lea.sflag [#allocation4], 1
    %33 = vsyncpa %s32, 0
    loop: start=0, step=1, limit=4
    $region2: #{tpu_custom_call.1} parent=1 // loop_pre_header
      _
    $region3: #{tpu_custom_call.1} parent=1 // loop_header
      %s35 = sphi 0, %s39
      %p36 = scmp.ge.s32.totalorder %s35, 4
      %s42 = sphi 0, %s54
      %s43 = sphi 0, %s50
      %s44 = sphi 0, %s42
      %s45 = sphi 0, %s43
      %s46 = sphi 0, %s44
      %s47 = sphi 0, %s45
      %s59 = sphi 0, %s61
      %s62 = sphi 0, %s59
      %s63 = sphi 0, %s62
      %s79 = sphi 0, %s63
      %s87 = sphi 0, %s89
      %s90 = sphi 0, %s87
      %s91 = sphi 0, %s90
      %s107 = sphi 0, %s91
      %s113 = sphi 0, %s115
      %s116 = sphi 0, %s113
      %s117 = sphi 0, %s116
      %s133 = sphi 0, %s117
      %s139 = sphi 0, %s141
      %s142 = sphi 0, %s139
      %s143 = sphi 0, %s142
      %s159 = sphi 0, %s143
      %s165 = sphi 0, %s167
      %s168 = sphi 0, %s165
      %s169 = sphi 0, %s168
      %s185 = sphi 0, %s169
      %s189 = sphi 0, %s189
      %s191 = sphi 0, %s189
      %s192 = sphi 0, %s191
      %s206 = sphi 0, %s192
      %s210 = sphi 0, %s210
      %s212 = sphi 0, %s210
      %s213 = sphi 0, %s212
      %s227 = sphi 0, %s213
      %s231 = sphi 0, %s231
      %s233 = sphi 0, %s231
      %s234 = sphi 0, %s233
      %s248 = sphi 0, %s234
      %s252 = sphi 0, %s252
      %s254 = sphi 0, %s252
      %s255 = sphi 0, %s254
      %s269 = sphi 0, %s255
      %s273 = sphi 0, %s273
      %s275 = sphi 0, %s273
      %s276 = sphi 0, %s275
      %s290 = sphi 0, %s276
      %s294 = sphi 0, %s294
      %s296 = sphi 0, %s294
      %s297 = sphi 0, %s296
      %s311 = sphi 0, %s297
      %s315 = sphi 0, %s315
      %s317 = sphi 0, %s315
      %s318 = sphi 0, %s317
      %s332 = sphi 0, %s318
      %s336 = sphi 0, %s336
      %s338 = sphi 0, %s336
      %s339 = sphi 0, %s338
      %s353 = sphi 0, %s339
      %s357 = sphi 0, %s357
      %s359 = sphi 0, %s357
      %s360 = sphi 0, %s359
      %s374 = sphi 0, %s360
      %s378 = sphi 0, %s378
      %s380 = sphi 0, %s378
      %s381 = sphi 0, %s380
      %s395 = sphi 0, %s381
      %s403 = sphi 0, %s405
      %s406 = sphi 0, %s403
      %s407 = sphi 0, %s406
      %s423 = sphi 0, %s407
    $region4: #{tpu_custom_call.1} parent=1 // loop_header_branch
      %38 = sbr.rel (%p36) target = $region8
    $region5: #{tpu_custom_call.1} parent=1 // loop_body
      %s40 = ssub.s32 %s35, 1
      %s41 = ssub.s32 %s35, 2
      %s48 = sadd.s32 1, %s43
      %p49 = scmp.ge.s32.totalorder %s48, 1
      %s50 = scalar_select %p49, 0, %s48
      %s51 = sadd.s32 1, %s42
      %s52 = scalar_select %p49, %s51, %s42
      %p53 = scmp.ge.s32.totalorder %s52, 2
      %s54 = scalar_select %p53, 0, %s52
      %s55 = ssub.s32 %s42, %s54
      %s56 = ssub.s32 %s43, %s50
      %s57 = sor.u32 %s55, %s56
      %p58 = scmp.eq.s32.totalorder %s57, 0
      %s60 = sadd.s32 %s59, 1
      %s61 = scalar_select %p58, %s59, %s60
      %p64 = pneg %p58
      %p65 = scmp.eq.s32.totalorder %s35, 1
      %p66 = por %p64, %p65
      %p67 = scmp.ne.s32.totalorder %s59, %s62
      %p68 = scmp.eq.s32.totalorder %s35, 0
      %p69 = por %p67, %p68
      %p70 = scmp.ne.s32.totalorder %s59, %s62
      %p71 = scmp.eq.s32.totalorder %s40, 1
      %p72 = por %p70, %p71
      %p73 = scmp.ne.s32.totalorder %s62, %s63
      %p74 = scmp.eq.s32.totalorder %s40, 0
      %p75 = por %p73, %p74
      %p76 = scmp.ne.s32.totalorder %s62, %s63
      %p77 = scmp.eq.s32.totalorder %s41, 1
      %p78 = por %p76, %p77
      %p80 = scmp.ne.s32.totalorder %s63, %s79
      %p81 = scmp.eq.s32.totalorder %s41, 0
      %p82 = por %p80, %p81
      %s83 = ssub.s32 %s42, %s54
      %s84 = ssub.s32 %s43, %s50
      %s85 = sor.u32 %s83, %s84
      %p86 = scmp.eq.s32.totalorder %s85, 0
      %s88 = sadd.s32 %s87, 1
      %s89 = scalar_select %p86, %s87, %s88
      %p92 = pneg %p86
      %p93 = scmp.eq.s32.totalorder %s35, 1
      %p94 = por %p92, %p93
      %p95 = scmp.ne.s32.totalorder %s87, %s90
      %p96 = scmp.eq.s32.totalorder %s35, 0
      %p97 = por %p95, %p96
      %p98 = scmp.ne.s32.totalorder %s87, %s90
      %p99 = scmp.eq.s32.totalorder %s40, 1
      %p100 = por %p98, %p99
      %p101 = scmp.ne.s32.totalorder %s90, %s91
      %p102 = scmp.eq.s32.totalorder %s40, 0
      %p103 = por %p101, %p102
      %p104 = scmp.ne.s32.totalorder %s90, %s91
      %p105 = scmp.eq.s32.totalorder %s41, 1
      %p106 = por %p104, %p105
      %p108 = scmp.ne.s32.totalorder %s91, %s107
      %p109 = scmp.eq.s32.totalorder %s41, 0
      %p110 = por %p108, %p109
      %s111 = ssub.s32 %s42, %s54
      %p112 = scmp.eq.s32.totalorder %s111, 0
      %s114 = sadd.s32 %s113, 1
      %s115 = scalar_select %p112, %s113, %s114
      %p118 = pneg %p112
      %p119 = scmp.eq.s32.totalorder %s35, 1
      %p120 = por %p118, %p119
      %p121 = scmp.ne.s32.totalorder %s113, %s116
      %p122 = scmp.eq.s32.totalorder %s35, 0
      %p123 = por %p121, %p122
      %p124 = scmp.ne.s32.totalorder %s113, %s116
      %p125 = scmp.eq.s32.totalorder %s40, 1
      %p126 = por %p124, %p125
      %p127 = scmp.ne.s32.totalorder %s116, %s117
      %p128 = scmp.eq.s32.totalorder %s40, 0
      %p129 = por %p127, %p128
      %p130 = scmp.ne.s32.totalorder %s116, %s117
      %p131 = scmp.eq.s32.totalorder %s41, 1
      %p132 = por %p130, %p131
      %p134 = scmp.ne.s32.totalorder %s117, %s133
      %p135 = scmp.eq.s32.totalorder %s41, 0
      %p136 = por %p134, %p135
      %s137 = ssub.s32 %s42, %s54
      %p138 = scmp.eq.s32.totalorder %s137, 0
      %s140 = sadd.s32 %s139, 1
      %s141 = scalar_select %p138, %s139, %s140
      %p144 = pneg %p138
      %p145 = scmp.eq.s32.totalorder %s35, 1
      %p146 = por %p144, %p145
      %p147 = scmp.ne.s32.totalorder %s139, %s142
      %p148 = scmp.eq.s32.totalorder %s35, 0
      %p149 = por %p147, %p148
      %p150 = scmp.ne.s32.totalorder %s139, %s142
      %p151 = scmp.eq.s32.totalorder %s40, 1
      %p152 = por %p150, %p151
      %p153 = scmp.ne.s32.totalorder %s142, %s143
      %p154 = scmp.eq.s32.totalorder %s40, 0
      %p155 = por %p153, %p154
      %p156 = scmp.ne.s32.totalorder %s142, %s143
      %p157 = scmp.eq.s32.totalorder %s41, 1
      %p158 = por %p156, %p157
      %p160 = scmp.ne.s32.totalorder %s143, %s159
      %p161 = scmp.eq.s32.totalorder %s41, 0
      %p162 = por %p160, %p161
      %s163 = ssub.s32 %s42, %s54
      %p164 = scmp.eq.s32.totalorder %s163, 0
      %s166 = sadd.s32 %s165, 1
      %s167 = scalar_select %p164, %s165, %s166
      %p170 = pneg %p164
      %p171 = scmp.eq.s32.totalorder %s35, 1
      %p172 = por %p170, %p171
      %p173 = scmp.ne.s32.totalorder %s165, %s168
      %p174 = scmp.eq.s32.totalorder %s35, 0
      %p175 = por %p173, %p174
      %p176 = scmp.ne.s32.totalorder %s165, %s168
      %p177 = scmp.eq.s32.totalorder %s40, 1
      %p178 = por %p176, %p177
      %p179 = scmp.ne.s32.totalorder %s168, %s169
      %p180 = scmp.eq.s32.totalorder %s40, 0
      %p181 = por %p179, %p180
      %p182 = scmp.ne.s32.totalorder %s168, %s169
      %p183 = scmp.eq.s32.totalorder %s41, 1
      %p184 = por %p182, %p183
      %p186 = scmp.ne.s32.totalorder %s169, %s185
      %p187 = scmp.eq.s32.totalorder %s41, 0
      %p188 = por %p186, %p187
      %s190 = sadd.s32 %s189, 1
      %p193 = scmp.eq.s32.totalorder %s35, 1
      %p194 = scmp.ne.s32.totalorder %s189, %s191
      %p195 = scmp.eq.s32.totalorder %s35, 0
      %p196 = por %p194, %p195
      %p197 = scmp.ne.s32.totalorder %s189, %s191
      %p198 = scmp.eq.s32.totalorder %s40, 1
      %p199 = por %p197, %p198
      %p200 = scmp.ne.s32.totalorder %s191, %s192
      %p201 = scmp.eq.s32.totalorder %s40, 0
      %p202 = por %p200, %p201
      %p203 = scmp.ne.s32.totalorder %s191, %s192
      %p204 = scmp.eq.s32.totalorder %s41, 1
      %p205 = por %p203, %p204
      %p207 = scmp.ne.s32.totalorder %s192, %s206
      %p208 = scmp.eq.s32.totalorder %s41, 0
      %p209 = por %p207, %p208
      %s211 = sadd.s32 %s210, 1
      %p214 = scmp.eq.s32.totalorder %s35, 1
      %p215 = scmp.ne.s32.totalorder %s210, %s212
      %p216 = scmp.eq.s32.totalorder %s35, 0
      %p217 = por %p215, %p216
      %p218 = scmp.ne.s32.totalorder %s210, %s212
      %p219 = scmp.eq.s32.totalorder %s40, 1
      %p220 = por %p218, %p219
      %p221 = scmp.ne.s32.totalorder %s212, %s213
      %p222 = scmp.eq.s32.totalorder %s40, 0
      %p223 = por %p221, %p222
      %p224 = scmp.ne.s32.totalorder %s212, %s213
      %p225 = scmp.eq.s32.totalorder %s41, 1
      %p226 = por %p224, %p225
      %p228 = scmp.ne.s32.totalorder %s213, %s227
      %p229 = scmp.eq.s32.totalorder %s41, 0
      %p230 = por %p228, %p229
      %s232 = sadd.s32 %s231, 1
      %p235 = scmp.eq.s32.totalorder %s35, 1
      %p236 = scmp.ne.s32.totalorder %s231, %s233
      %p237 = scmp.eq.s32.totalorder %s35, 0
      %p238 = por %p236, %p237
      %p239 = scmp.ne.s32.totalorder %s231, %s233
      %p240 = scmp.eq.s32.totalorder %s40, 1
      %p241 = por %p239, %p240
      %p242 = scmp.ne.s32.totalorder %s233, %s234
      %p243 = scmp.eq.s32.totalorder %s40, 0
      %p244 = por %p242, %p243
      %p245 = scmp.ne.s32.totalorder %s233, %s234
      %p246 = scmp.eq.s32.totalorder %s41, 1
      %p247 = por %p245, %p246
      %p249 = scmp.ne.s32.totalorder %s234, %s248
      %p250 = scmp.eq.s32.totalorder %s41, 0
      %p251 = por %p249, %p250
      %s253 = sadd.s32 %s252, 1
      %p256 = scmp.eq.s32.totalorder %s35, 1
      %p257 = scmp.ne.s32.totalorder %s252, %s254
      %p258 = scmp.eq.s32.totalorder %s35, 0
      %p259 = por %p257, %p258
      %p260 = scmp.ne.s32.totalorder %s252, %s254
      %p261 = scmp.eq.s32.totalorder %s40, 1
      %p262 = por %p260, %p261
      %p263 = scmp.ne.s32.totalorder %s254, %s255
      %p264 = scmp.eq.s32.totalorder %s40, 0
      %p265 = por %p263, %p264
      %p266 = scmp.ne.s32.totalorder %s254, %s255
      %p267 = scmp.eq.s32.totalorder %s41, 1
      %p268 = por %p266, %p267
      %p270 = scmp.ne.s32.totalorder %s255, %s269
      %p271 = scmp.eq.s32.totalorder %s41, 0
      %p272 = por %p270, %p271
      %s274 = sadd.s32 %s273, 1
      %p277 = scmp.eq.s32.totalorder %s35, 1
      %p278 = scmp.ne.s32.totalorder %s273, %s275
      %p279 = scmp.eq.s32.totalorder %s35, 0
      %p280 = por %p278, %p279
      %p281 = scmp.ne.s32.totalorder %s273, %s275
      %p282 = scmp.eq.s32.totalorder %s40, 1
      %p283 = por %p281, %p282
      %p284 = scmp.ne.s32.totalorder %s275, %s276
      %p285 = scmp.eq.s32.totalorder %s40, 0
      %p286 = por %p284, %p285
      %p287 = scmp.ne.s32.totalorder %s275, %s276
      %p288 = scmp.eq.s32.totalorder %s41, 1
      %p289 = por %p287, %p288
      %p291 = scmp.ne.s32.totalorder %s276, %s290
      %p292 = scmp.eq.s32.totalorder %s41, 0
      %p293 = por %p291, %p292
      %s295 = sadd.s32 %s294, 1
      %p298 = scmp.eq.s32.totalorder %s35, 1
      %p299 = scmp.ne.s32.totalorder %s294, %s296
      %p300 = scmp.eq.s32.totalorder %s35, 0
      %p301 = por %p299, %p300
      %p302 = scmp.ne.s32.totalorder %s294, %s296
      %p303 = scmp.eq.s32.totalorder %s40, 1
      %p304 = por %p302, %p303
      %p305 = scmp.ne.s32.totalorder %s296, %s297
      %p306 = scmp.eq.s32.totalorder %s40, 0
      %p307 = por %p305, %p306
      %p308 = scmp.ne.s32.totalorder %s296, %s297
      %p309 = scmp.eq.s32.totalorder %s41, 1
      %p310 = por %p308, %p309
      %p312 = scmp.ne.s32.totalorder %s297, %s311
      %p313 = scmp.eq.s32.totalorder %s41, 0
      %p314 = por %p312, %p313
      %s316 = sadd.s32 %s315, 1
      %p319 = scmp.eq.s32.totalorder %s35, 1
      %p320 = scmp.ne.s32.totalorder %s315, %s317
      %p321 = scmp.eq.s32.totalorder %s35, 0
      %p322 = por %p320, %p321
      %p323 = scmp.ne.s32.totalorder %s315, %s317
      %p324 = scmp.eq.s32.totalorder %s40, 1
      %p325 = por %p323, %p324
      %p326 = scmp.ne.s32.totalorder %s317, %s318
      %p327 = scmp.eq.s32.totalorder %s40, 0
      %p328 = por %p326, %p327
      %p329 = scmp.ne.s32.totalorder %s317, %s318
      %p330 = scmp.eq.s32.totalorder %s41, 1
      %p331 = por %p329, %p330
      %p333 = scmp.ne.s32.totalorder %s318, %s332
      %p334 = scmp.eq.s32.totalorder %s41, 0
      %p335 = por %p333, %p334
      %s337 = sadd.s32 %s336, 1
      %p340 = scmp.eq.s32.totalorder %s35, 1
      %p341 = scmp.ne.s32.totalorder %s336, %s338
      %p342 = scmp.eq.s32.totalorder %s35, 0
      %p343 = por %p341, %p342
      %p344 = scmp.ne.s32.totalorder %s336, %s338
      %p345 = scmp.eq.s32.totalorder %s40, 1
      %p346 = por %p344, %p345
      %p347 = scmp.ne.s32.totalorder %s338, %s339
      %p348 = scmp.eq.s32.totalorder %s40, 0
      %p349 = por %p347, %p348
      %p350 = scmp.ne.s32.totalorder %s338, %s339
      %p351 = scmp.eq.s32.totalorder %s41, 1
      %p352 = por %p350, %p351
      %p354 = scmp.ne.s32.totalorder %s339, %s353
      %p355 = scmp.eq.s32.totalorder %s41, 0
      %p356 = por %p354, %p355
      %s358 = sadd.s32 %s357, 1
      %p361 = scmp.eq.s32.totalorder %s35, 1
      %p362 = scmp.ne.s32.totalorder %s357, %s359
      %p363 = scmp.eq.s32.totalorder %s35, 0
      %p364 = por %p362, %p363
      %p365 = scmp.ne.s32.totalorder %s357, %s359
      %p366 = scmp.eq.s32.totalorder %s40, 1
      %p367 = por %p365, %p366
      %p368 = scmp.ne.s32.totalorder %s359, %s360
      %p369 = scmp.eq.s32.totalorder %s40, 0
      %p370 = por %p368, %p369
      %p371 = scmp.ne.s32.totalorder %s359, %s360
      %p372 = scmp.eq.s32.totalorder %s41, 1
      %p373 = por %p371, %p372
      %p375 = scmp.ne.s32.totalorder %s360, %s374
      %p376 = scmp.eq.s32.totalorder %s41, 0
      %p377 = por %p375, %p376
      %s379 = sadd.s32 %s378, 1
      %p382 = scmp.eq.s32.totalorder %s35, 1
      %p383 = scmp.ne.s32.totalorder %s378, %s380
      %p384 = scmp.eq.s32.totalorder %s35, 0
      %p385 = por %p383, %p384
      %p386 = scmp.ne.s32.totalorder %s378, %s380
      %p387 = scmp.eq.s32.totalorder %s40, 1
      %p388 = por %p386, %p387
      %p389 = scmp.ne.s32.totalorder %s380, %s381
      %p390 = scmp.eq.s32.totalorder %s40, 0
      %p391 = por %p389, %p390
      %p392 = scmp.ne.s32.totalorder %s380, %s381
      %p393 = scmp.eq.s32.totalorder %s41, 1
      %p394 = por %p392, %p393
      %p396 = scmp.ne.s32.totalorder %s381, %s395
      %p397 = scmp.eq.s32.totalorder %s41, 0
      %p398 = por %p396, %p397
      %s399 = ssub.s32 %s42, %s54
      %s400 = ssub.s32 %s43, %s50
      %s401 = sor.u32 %s399, %s400
      %p402 = scmp.eq.s32.totalorder %s401, 0
      %s404 = sadd.s32 %s403, 1
      %s405 = scalar_select %p402, %s403, %s404
      %p408 = pneg %p402
      %p409 = scmp.eq.s32.totalorder %s35, 1
      %p410 = por %p408, %p409
      %p411 = scmp.ne.s32.totalorder %s403, %s406
      %p412 = scmp.eq.s32.totalorder %s35, 0
      %p413 = por %p411, %p412
      %p414 = scmp.ne.s32.totalorder %s403, %s406
      %p415 = scmp.eq.s32.totalorder %s40, 1
      %p416 = por %p414, %p415
      %p417 = scmp.ne.s32.totalorder %s406, %s407
      %p418 = scmp.eq.s32.totalorder %s40, 0
      %p419 = por %p417, %p418
      %p420 = scmp.ne.s32.totalorder %s406, %s407
      %p421 = scmp.eq.s32.totalorder %s41, 1
      %p422 = por %p420, %p421
      %p424 = scmp.ne.s32.totalorder %s407, %s423
      %p425 = scmp.eq.s32.totalorder %s41, 0
      %p426 = por %p424, %p425
      %p427 = scmp.le.s32.totalorder 1, %s35
      %p428 = scmp.lt.s32.totalorder %s35, 3
      %p429 = pnand %p427, %p428
      %p430 = pneg %p429
      // Predicated region
      $region9: #{tpu_custom_call.1} parent=5 // pred_check
        _
      $region10: #{tpu_custom_call.1} parent=5 // pred_check_branch
        %432 = sbr.rel (%p429) target = $region12
      $region11: #{tpu_custom_call.1} parent=5 // pred_region
        %s433 = ssub.s32 %s35, 1
        // Predicated region
        $region13: #{tpu_custom_call.1} parent=11 // pred_check
          %p434 = pneg %p202
        $region14: #{tpu_custom_call.1} parent=11 // pred_check_branch
          %436 = sbr.rel (%p434) target = $region16
        $region15: #{tpu_custom_call.1} parent=11 // pred_region
          %s438 = ssub.s32 512, 512
          %439 = vsyncadd [#allocation12], %s438
          %s440 = sshll.u32 [#allocation11], 4
          %s441 = int_to_ptr.vmem [resolvable:$true] %s440
          %446 = dma.hbm_to_vmem [thread:$0]  %s5, 512, %s441, [#allocation12], 128, 128, 8
        $region16: #{tpu_custom_call.1} parent=11 // pred_fallthru
          _
        // Predicated region
        $region17: #{tpu_custom_call.1} parent=11 // pred_check
          %p447 = pneg %p223
        $region18: #{tpu_custom_call.1} parent=11 // pred_check_branch
          %449 = sbr.rel (%p447) target = $region20
        $region19: #{tpu_custom_call.1} parent=11 // pred_region
          _
        $region20: #{tpu_custom_call.1} parent=11 // pred_fallthru
          _
        // Predicated region
        $region21: #{tpu_custom_call.1} parent=11 // pred_check
          %p450 = pneg %p244
        $region22: #{tpu_custom_call.1} parent=11 // pred_check_branch
          %452 = sbr.rel (%p450) target = $region24
        $region23: #{tpu_custom_call.1} parent=11 // pred_region
          %s454 = ssub.s32 512, 512
          %455 = vsyncadd [#allocation12], %s454
          %s456 = sshll.u32 [#allocation13], 4
          %s457 = int_to_ptr.vmem [resolvable:$true] %s456
          %462 = dma.hbm_to_vmem [thread:$0]  %s7, 512, %s457, [#allocation12], 128, 128, 8
        $region24: #{tpu_custom_call.1} parent=11 // pred_fallthru
          _
        // Predicated region
        $region25: #{tpu_custom_call.1} parent=11 // pred_check
          %p463 = pneg %p265
        $region26: #{tpu_custom_call.1} parent=11 // pred_check_branch
          %465 = sbr.rel (%p463) target = $region28
        $region27: #{tpu_custom_call.1} parent=11 // pred_region
          _
        $region28: #{tpu_custom_call.1} parent=11 // pred_fallthru
          _
        // Predicated region
        $region29: #{tpu_custom_call.1} parent=11 // pred_check
          %p466 = pneg %p286
        $region30: #{tpu_custom_call.1} parent=11 // pred_check_branch
          %468 = sbr.rel (%p466) target = $region32
        $region31: #{tpu_custom_call.1} parent=11 // pred_region
          _
        $region32: #{tpu_custom_call.1} parent=11 // pred_fallthru
          _
        // Predicated region
        $region33: #{tpu_custom_call.1} parent=11 // pred_check
          %p469 = pneg %p307
        $region34: #{tpu_custom_call.1} parent=11 // pred_check_branch
          %471 = sbr.rel (%p469) target = $region36
        $region35: #{tpu_custom_call.1} parent=11 // pred_region
          _
        $region36: #{tpu_custom_call.1} parent=11 // pred_fallthru
          _
        // Predicated region
        $region37: #{tpu_custom_call.1} parent=11 // pred_check
          %p472 = pneg %p328
        $region38: #{tpu_custom_call.1} parent=11 // pred_check_branch
          %474 = sbr.rel (%p472) target = $region40
        $region39: #{tpu_custom_call.1} parent=11 // pred_region
          %s476 = ssub.s32 512, 512
          %477 = vsyncadd [#allocation15], %s476
          %s478 = sshll.u32 [#allocation14], 4
          %s479 = int_to_ptr.vmem [resolvable:$true] %s478
          %484 = dma.hbm_to_vmem [thread:$0]  %s11, 512, %s479, [#allocation15], 128, 128, 8
        $region40: #{tpu_custom_call.1} parent=11 // pred_fallthru
          _
        // Predicated region
        $region41: #{tpu_custom_call.1} parent=11 // pred_check
          %p485 = pneg %p349
        $region42: #{tpu_custom_call.1} parent=11 // pred_check_branch
          %487 = sbr.rel (%p485) target = $region44
        $region43: #{tpu_custom_call.1} parent=11 // pred_region
          _
        $region44: #{tpu_custom_call.1} parent=11 // pred_fallthru
          _
        // Predicated region
        $region45: #{tpu_custom_call.1} parent=11 // pred_check
          %p488 = pneg %p370
        $region46: #{tpu_custom_call.1} parent=11 // pred_check_branch
          %490 = sbr.rel (%p488) target = $region48
        $region47: #{tpu_custom_call.1} parent=11 // pred_region
          _
        $region48: #{tpu_custom_call.1} parent=11 // pred_fallthru
          _
        // Predicated region
        $region49: #{tpu_custom_call.1} parent=11 // pred_check
          %p491 = pneg %p391
        $region50: #{tpu_custom_call.1} parent=11 // pred_check_branch
          %493 = sbr.rel (%p491) target = $region52
        $region51: #{tpu_custom_call.1} parent=11 // pred_region
          _
        $region52: #{tpu_custom_call.1} parent=11 // pred_fallthru
          _
      $region12: #{tpu_custom_call.1} parent=5 // pred_fallthru
        _
      %p494 = scmp.lt.s32.totalorder %s35, 2
      // Predicated region
      $region53: #{tpu_custom_call.1} parent=5 // pred_check
        %p495 = pneg %p494
      $region54: #{tpu_custom_call.1} parent=5 // pred_check_branch
        %497 = sbr.rel (%p495) target = $region56
      $region55: #{tpu_custom_call.1} parent=5 // pred_region
        // Predicated region
        $region57: #{tpu_custom_call.1} parent=55 // pred_check
          %p498 = pneg %p69
        $region58: #{tpu_custom_call.1} parent=55 // pred_check_branch
          %500 = sbr.rel (%p498) target = $region60
        $region59: #{tpu_custom_call.1} parent=55 // pred_region
          %s501 = sand.u32 %s59, 1
          %s502 = scalar_lea.sflag [#allocation3], %s501
          %s503 = sand.u32 %s59, 1
          %s504 = smul.addr %s503, 8
          %s505 = scalar_lea.vmem [#allocation2], %s504
          %s507 = ssub.s32 128, 128
          %508 = vsyncadd %s502, %s507
          %s509 = sadd.s32 %s43, %s42
          %s510 = smul.addr %s509, 128
          %s511 = scalar_lea.hbm %s0, %s510
          %s513 = sshll.u32 %s505, 4
          %s514 = int_to_ptr.vmem [resolvable:$true] %s513
          %516 = dma.hbm_to_vmem [thread:$0]  %s511, 128, %s514, %s502
        $region60: #{tpu_custom_call.1} parent=55 // pred_fallthru
          _
        // Predicated region
        $region61: #{tpu_custom_call.1} parent=55 // pred_check
          %p517 = pneg %p97
        $region62: #{tpu_custom_call.1} parent=55 // pred_check_branch
          %519 = sbr.rel (%p517) target = $region64
        $region63: #{tpu_custom_call.1} parent=55 // pred_region
          %s520 = sand.u32 %s35, 1
          %s521 = scalar_lea.sflag [#allocation6], %s520
          %s522 = sand.u32 %s87, 1
          %s523 = smul.addr %s522, 8
          %s524 = scalar_lea.vmem [#allocation5], %s523
          %s526 = ssub.s32 128, 128
          %527 = vsyncadd %s521, %s526
          %s528 = sadd.s32 %s43, %s42
          %s529 = smul.addr %s528, 128
          %s530 = scalar_lea.hbm %s1, %s529
          %s532 = sshll.u32 %s524, 4
          %s533 = int_to_ptr.vmem [resolvable:$true] %s532
          %535 = dma.hbm_to_vmem [thread:$0]  %s530, 128, %s533, %s521
        $region64: #{tpu_custom_call.1} parent=55 // pred_fallthru
          _
        // Predicated region
        $region65: #{tpu_custom_call.1} parent=55 // pred_check
          %p536 = pneg %p123
        $region66: #{tpu_custom_call.1} parent=55 // pred_check_branch
          %538 = sbr.rel (%p536) target = $region68
        $region67: #{tpu_custom_call.1} parent=55 // pred_region
          %s539 = sand.u32 %s35, 1
          %s540 = scalar_lea.sflag [#allocation6], %s539
          %s541 = sand.u32 %s113, 1
          %s542 = smul.addr %s541, 8
          %s543 = scalar_lea.vmem [#allocation7], %s542
          %s545 = ssub.s32 128, 128
          %546 = vsyncadd %s540, %s545
          %s547 = smul.addr %s42, 128
          %s548 = scalar_lea.hbm %s2, %s547
          %s550 = sshll.u32 %s543, 4
          %s551 = int_to_ptr.vmem [resolvable:$true] %s550
          %553 = dma.hbm_to_vmem [thread:$0]  %s548, 128, %s551, %s540
        $region68: #{tpu_custom_call.1} parent=55 // pred_fallthru
          _
        // Predicated region
        $region69: #{tpu_custom_call.1} parent=55 // pred_check
          %p554 = pneg %p149
        $region70: #{tpu_custom_call.1} parent=55 // pred_check_branch
          %556 = sbr.rel (%p554) target = $region72
        $region71: #{tpu_custom_call.1} parent=55 // pred_region
          %s557 = sand.u32 %s35, 1
          %s558 = scalar_lea.sflag [#allocation9], %s557
          %s559 = sand.u32 %s139, 1
          %s560 = smul.addr %s559, 8
          %s561 = scalar_lea.vmem [#allocation8], %s560
          %s563 = ssub.s32 128, 128
          %564 = vsyncadd %s558, %s563
          %s565 = smul.addr %s42, 128
          %s566 = scalar_lea.hbm %s3, %s565
          %s568 = sshll.u32 %s561, 4
          %s569 = int_to_ptr.vmem [resolvable:$true] %s568
          %571 = dma.hbm_to_vmem [thread:$0]  %s566, 128, %s569, %s558
        $region72: #{tpu_custom_call.1} parent=55 // pred_fallthru
          _
        // Predicated region
        $region73: #{tpu_custom_call.1} parent=55 // pred_check
          %p572 = pneg %p175
        $region74: #{tpu_custom_call.1} parent=55 // pred_check_branch
          %574 = sbr.rel (%p572) target = $region76
        $region75: #{tpu_custom_call.1} parent=55 // pred_region
          %s575 = sand.u32 %s35, 1
          %s576 = scalar_lea.sflag [#allocation9], %s575
          %s577 = sand.u32 %s165, 1
          %s578 = smul.addr %s577, 8
          %s579 = scalar_lea.vmem [#allocation10], %s578
          %s581 = ssub.s32 128, 128
          %582 = vsyncadd %s576, %s581
          %s583 = smul.addr %s42, 128
          %s584 = scalar_lea.hbm %s4, %s583
          %s586 = sshll.u32 %s579, 4
          %s587 = int_to_ptr.vmem [resolvable:$true] %s586
          %589 = dma.hbm_to_vmem [thread:$0]  %s584, 128, %s587, %s576
        $region76: #{tpu_custom_call.1} parent=55 // pred_fallthru
          _
      $region56: #{tpu_custom_call.1} parent=5 // pred_fallthru
        _
      %p590 = scmp.le.s32.totalorder 1, %s35
      %p591 = scmp.lt.s32.totalorder %s35, 3
      %p592 = pnand %p590, %p591
      %p593 = pneg %p592
      // Predicated region
      $region77: #{tpu_custom_call.1} parent=5 // pred_check
        _
      $region78: #{tpu_custom_call.1} parent=5 // pred_check_branch
        %595 = sbr.rel (%p592) target = $region80
      $region79: #{tpu_custom_call.1} parent=5 // pred_region
        %s596 = ssub.s32 %s35, 1
        %s597 = sand.u32 %s62, 1
        %s598 = scalar_lea.sflag [#allocation3], %s597
        %s599 = sand.u32 %s62, 1
        %s600 = smul.addr %s599, 8
        %s601 = scalar_lea.vmem [#allocation2], %s600
        // Predicated region
        $region81: #{tpu_custom_call.1} parent=79 // pred_check
          %p602 = pneg %p75
        $region82: #{tpu_custom_call.1} parent=79 // pred_check_branch
          %604 = sbr.rel (%p602) target = $region84
        $region83: #{tpu_custom_call.1} parent=79 // pred_region
          %605 = dma.done %s598, 128
        $region84: #{tpu_custom_call.1} parent=79 // pred_fallthru
          _
        %s606 = sand.u32 %s40, 1
        %s607 = scalar_lea.sflag [#allocation6], %s606
        %s608 = sand.u32 %s90, 1
        %s609 = smul.addr %s608, 8
        %s610 = scalar_lea.vmem [#allocation5], %s609
        // Predicated region
        $region85: #{tpu_custom_call.1} parent=79 // pred_check
          %p611 = pneg %p103
        $region86: #{tpu_custom_call.1} parent=79 // pred_check_branch
          %613 = sbr.rel (%p611) target = $region88
        $region87: #{tpu_custom_call.1} parent=79 // pred_region
          %614 = dma.done %s607, 128
        $region88: #{tpu_custom_call.1} parent=79 // pred_fallthru
          _
        %s615 = sand.u32 %s40, 1
        %s616 = scalar_lea.sflag [#allocation6], %s615
        %s617 = sand.u32 %s116, 1
        %s618 = smul.addr %s617, 8
        %s619 = scalar_lea.vmem [#allocation7], %s618
        // Predicated region
        $region89: #{tpu_custom_call.1} parent=79 // pred_check
          %p620 = pneg %p129
        $region90: #{tpu_custom_call.1} parent=79 // pred_check_branch
          %622 = sbr.rel (%p620) target = $region92
        $region91: #{tpu_custom_call.1} parent=79 // pred_region
          %623 = dma.done %s616, 128
        $region92: #{tpu_custom_call.1} parent=79 // pred_fallthru
          _
        %s624 = sand.u32 %s40, 1
        %s625 = scalar_lea.sflag [#allocation9], %s624
        %s626 = sand.u32 %s142, 1
        %s627 = smul.addr %s626, 8
        %s628 = scalar_lea.vmem [#allocation8], %s627
        // Predicated region
        $region93: #{tpu_custom_call.1} parent=79 // pred_check
          %p629 = pneg %p155
        $region94: #{tpu_custom_call.1} parent=79 // pred_check_branch
          %631 = sbr.rel (%p629) target = $region96
        $region95: #{tpu_custom_call.1} parent=79 // pred_region
          %632 = dma.done %s625, 128
        $region96: #{tpu_custom_call.1} parent=79 // pred_fallthru
          _
        %s633 = sand.u32 %s40, 1
        %s634 = scalar_lea.sflag [#allocation9], %s633
        %s635 = sand.u32 %s168, 1
        %s636 = smul.addr %s635, 8
        %s637 = scalar_lea.vmem [#allocation10], %s636
        // Predicated region
        $region97: #{tpu_custom_call.1} parent=79 // pred_check
          %p638 = pneg %p181
        $region98: #{tpu_custom_call.1} parent=79 // pred_check_branch
          %640 = sbr.rel (%p638) target = $region100
        $region99: #{tpu_custom_call.1} parent=79 // pred_region
          %641 = dma.done %s634, 128
        $region100: #{tpu_custom_call.1} parent=79 // pred_fallthru
          _
        // Predicated region
        $region101: #{tpu_custom_call.1} parent=79 // pred_check
          %p642 = pneg %p202
        $region102: #{tpu_custom_call.1} parent=79 // pred_check_branch
          %644 = sbr.rel (%p642) target = $region104
        $region103: #{tpu_custom_call.1} parent=79 // pred_region
          %645 = dma.done [#allocation12], 512
        $region104: #{tpu_custom_call.1} parent=79 // pred_fallthru
          _
        // Predicated region
        $region105: #{tpu_custom_call.1} parent=79 // pred_check
          %p646 = pneg %p244
        $region106: #{tpu_custom_call.1} parent=79 // pred_check_branch
          %648 = sbr.rel (%p646) target = $region108
        $region107: #{tpu_custom_call.1} parent=79 // pred_region
          %649 = dma.done [#allocation12], 512
        $region108: #{tpu_custom_call.1} parent=79 // pred_fallthru
          _
        // Predicated region
        $region109: #{tpu_custom_call.1} parent=79 // pred_check
          %p650 = pneg %p328
        $region110: #{tpu_custom_call.1} parent=79 // pred_check_branch
          %652 = sbr.rel (%p650) target = $region112
        $region111: #{tpu_custom_call.1} parent=79 // pred_region
          %653 = dma.done [#allocation15], 512
        $region112: #{tpu_custom_call.1} parent=79 // pred_fallthru
          _
        %s654 = sand.u32 %s62, 1
        %s655 = scalar_lea.sflag [#allocation3], %s654
        %s656 = sand.u32 %s62, 1
        %s657 = smul.addr %s656, 8
        %s658 = scalar_lea.vmem [#allocation2], %s657
        %p659 = pneg %p75
        %p660 = pneg %p72
        %s661 = sand.u32 %s40, 1
        %s662 = scalar_lea.sflag [#allocation6], %s661
        %s663 = sand.u32 %s90, 1
        %s664 = smul.addr %s663, 8
        %s665 = scalar_lea.vmem [#allocation5], %s664
        %p666 = pneg %p103
        %p667 = pneg %p100
        %s668 = sand.u32 %s40, 1
        %s669 = scalar_lea.sflag [#allocation6], %s668
        %s670 = sand.u32 %s116, 1
        %s671 = smul.addr %s670, 8
        %s672 = scalar_lea.vmem [#allocation7], %s671
        %p673 = pneg %p129
        %p674 = pneg %p126
        %s675 = sand.u32 %s40, 1
        %s676 = scalar_lea.sflag [#allocation9], %s675
        %s677 = sand.u32 %s142, 1
        %s678 = smul.addr %s677, 8
        %s679 = scalar_lea.vmem [#allocation8], %s678
        %p680 = pneg %p155
        %p681 = pneg %p152
        %s682 = sand.u32 %s40, 1
        %s683 = scalar_lea.sflag [#allocation9], %s682
        %s684 = sand.u32 %s168, 1
        %s685 = smul.addr %s684, 8
        %s686 = scalar_lea.vmem [#allocation10], %s685
        %p687 = pneg %p181
        %p688 = pneg %p178
        %p689 = pneg %p202
        %p690 = pneg %p199
        %p691 = pneg %p223
        %p692 = pneg %p220
        %p693 = pneg %p244
        %p694 = pneg %p241
        %p695 = pneg %p265
        %p696 = pneg %p262
        %p697 = pneg %p286
        %p698 = pneg %p283
        %p699 = pneg %p307
        %p700 = pneg %p304
        %p701 = pneg %p328
        %p702 = pneg %p325
        %p703 = pneg %p349
        %p704 = pneg %p346
        %p705 = pneg %p370
        %p706 = pneg %p367
        %p707 = pneg %p391
        %p708 = pneg %p388
        %p709 = pneg %p419
        %p710 = pneg %p416
        %s711 = sand.u32 %s406, 1
        %s712 = scalar_lea.sflag [#allocation4], %s711
        %s713 = sand.u32 %s406, 1
        %s714 = smul.addr %s713, 8
        %s715 = scalar_lea.vmem [#allocation16], %s714
        %v716 = vld [vmem:[%s601] sm:$0xff]
        %v717 = vld [vmem:[%s610] sm:$0xff]
        %v718 = vadd.f32 %v716, %v717
        %v719 = vld [vmem:[%s619] sm:$0xff]
        %v720 = vld [vmem:[%s628] sm:$0xff]
        %v721 = vadd.f32 %v719, %v720
        %v722 = vld [vmem:[%s637] sm:$0xff]
        %v723 = vld [vmem:[#allocation11] sm:$0xff]
        %v724 = vld [vmem:[#allocation11 + $0x8] sm:$0xff]
        %v725 = vld [vmem:[#allocation11 + $0x10] sm:$0xff]
        %v726 = vld [vmem:[#allocation11 + $0x18] sm:$0xff]
        %v727 = vld [vmem:[%s6] sm:$0x1]
        %v729 = vlaneseq
        %v730 = vshrl.u32 %v729, 7
        %v731 = vsub.s32 0, %v730
        %v732 = vrot.slane %v727, %v731
        %vm734 = vcmask 261120
        %v736 = vsel %vm734, %v718, 0
        %738 = vmatprep.subr.mxu0 0.0
        %739 = vmatpush1.msra.mxu0 %v723
        %740 = vmatprep.subr.mxu0 0.0
        %741 = vmatpush1.msra.mxu0 %v724
        %742 = vmatprep.subr.mxu0 0.0
        %743 = vmatpush1.msra.mxu0 %v725
        %744 = vmatprep.subr.mxu0 0.0
        %745 = vmatpush1.msra.mxu0 %v726
        %746 = vmatprep.subr.mxu0 0.0
        %747 = vmatpush1.msra.mxu0 0.0
        %748 = vmatprep.subr.mxu0 0.0
        %749 = vmatpush1.msra.mxu0 0.0
        %750 = vmatprep.subr.mxu0 0.0
        %751 = vmatpush1.msra.mxu0 0.0
        %752 = vmatprep.subr.mxu0 0.0
        %753 = vmatpush1.msra.mxu0 0.0
        %754 = vmatprep.subr.mxu0 0.0
        %755 = vmatpush1.msra.mxu0 0.0
        %756 = vmatprep.subr.mxu0 0.0
        %757 = vmatpush1.msra.mxu0 0.0
        %758 = vmatprep.subr.mxu0 0.0
        %759 = vmatpush1.msra.mxu0 0.0
        %760 = vmatprep.subr.mxu0 0.0
        %761 = vmatpush1.msra.mxu0 0.0
        %762 = vmatprep.subr.mxu0 0.0
        %763 = vmatpush1.msra.mxu0 0.0
        %764 = vmatprep.subr.mxu0 0.0
        %765 = vmatpush1.msra.mxu0 0.0
        %766 = vmatprep.subr.mxu0 0.0
        %767 = vmatpush1.msra.mxu0 0.0
        %768 = vmatprep.subr.mxu0 0.0
        %769 = vmatpush1.msra.mxu0 0.0
        %770 = vmatprep.subr.mxu0 0.0
        %771 = vmatpush1.msra.mxu0 0.0
        %772 = vmatprep.subr.mxu0 0.0
        %773 = vmatpush1.msra.mxu0 0.0
        %774 = vmatprep.subr.mxu0 0.0
        %775 = vmatpush1.msra.mxu0 0.0
        %776 = vmatprep.subr.mxu0 0.0
        %777 = vmatpush1.msra.mxu0 0.0
        %778 = vmatprep.subr.mxu0 0.0
        %779 = vmatpush1.msra.mxu0 0.0
        %780 = vmatprep.subr.mxu0 0.0
        %781 = vmatpush1.msra.mxu0 0.0
        %782 = vmatprep.subr.mxu0 0.0
        %783 = vmatpush1.msra.mxu0 0.0
        %784 = vmatprep.subr.mxu0 0.0
        %785 = vmatpush1.msra.mxu0 0.0
        %786 = vmatprep.subr.mxu0 0.0
        %787 = vmatpush1.msra.mxu0 0.0
        %788 = vmatprep.subr.mxu0 0.0
        %789 = vmatpush1.msra.mxu0 0.0
        %790 = vmatprep.subr.mxu0 0.0
        %791 = vmatpush1.msra.mxu0 0.0
        %792 = vmatprep.subr.mxu0 0.0
        %793 = vmatpush1.msra.mxu0 0.0
        %794 = vmatprep.subr.mxu0 0.0
        %795 = vmatpush1.msra.mxu0 0.0
        %796 = vmatprep.subr.mxu0 0.0
        %797 = vmatpush1.msra.mxu0 0.0
        %798 = vmatprep.subr.mxu0 0.0
        %799 = vmatpush1.msra.mxu0 0.0
        %800 = vmatprep.subr.mxu0 0.0
        %801 = vmatpush1.msra.mxu0 0.0
        %802 = vmatprep.mubr.f32.mxu0 0.0
        %803 = vmatmul.mubr.f32.gmra.mrb[0].mxu0 %v736
        %v804 = vpop.f32.mrb[0].mxu0
        %v805 = vadd.f32 %v732, %v804
        %v806 = vpop.f32.mrb[0].mxu0
        %807 = vdwg.mxu0
        %v808 = vld [vmem:[#allocation13] sm:$0xff]
        %v809 = vld [vmem:[#allocation13 + $0x8] sm:$0xff]
        %v810 = vld [vmem:[#allocation13 + $0x10] sm:$0xff]
        %v811 = vld [vmem:[#allocation13 + $0x18] sm:$0xff]
        %v812 = vld [vmem:[%s8] sm:$0x1]
        %v814 = vlaneseq
        %v815 = vshrl.u32 %v814, 7
        %v816 = vsub.s32 0, %v815
        %v817 = vrot.slane %v812, %v816
        %v820 = vsel %vm734, %v721, 0
        %822 = vmatprep.subr.mxu0 0.0
        %823 = vmatpush1.msra.mxu0 %v808
        %824 = vmatprep.subr.mxu0 0.0
        %825 = vmatpush1.msra.mxu0 %v809
        %826 = vmatprep.subr.mxu0 0.0
        %827 = vmatpush1.msra.mxu0 %v810
        %828 = vmatprep.subr.mxu0 0.0
        %829 = vmatpush1.msra.mxu0 %v811
        %830 = vmatprep.subr.mxu0 0.0
        %831 = vmatpush1.msra.mxu0 0.0
        %832 = vmatprep.subr.mxu0 0.0
        %833 = vmatpush1.msra.mxu0 0.0
        %834 = vmatprep.subr.mxu0 0.0
        %835 = vmatpush1.msra.mxu0 0.0
        %836 = vmatprep.subr.mxu0 0.0
        %837 = vmatpush1.msra.mxu0 0.0
        %838 = vmatprep.subr.mxu0 0.0
        %839 = vmatpush1.msra.mxu0 0.0
        %840 = vmatprep.subr.mxu0 0.0
        %841 = vmatpush1.msra.mxu0 0.0
        %842 = vmatprep.subr.mxu0 0.0
        %843 = vmatpush1.msra.mxu0 0.0
        %844 = vmatprep.subr.mxu0 0.0
        %845 = vmatpush1.msra.mxu0 0.0
        %846 = vmatprep.subr.mxu0 0.0
        %847 = vmatpush1.msra.mxu0 0.0
        %848 = vmatprep.subr.mxu0 0.0
        %849 = vmatpush1.msra.mxu0 0.0
        %850 = vmatprep.subr.mxu0 0.0
        %851 = vmatpush1.msra.mxu0 0.0
        %852 = vmatprep.subr.mxu0 0.0
        %853 = vmatpush1.msra.mxu0 0.0
        %854 = vmatprep.subr.mxu0 0.0
        %855 = vmatpush1.msra.mxu0 0.0
        %856 = vmatprep.subr.mxu0 0.0
        %857 = vmatpush1.msra.mxu0 0.0
        %858 = vmatprep.subr.mxu0 0.0
        %859 = vmatpush1.msra.mxu0 0.0
        %860 = vmatprep.subr.mxu0 0.0
        %861 = vmatpush1.msra.mxu0 0.0
        %862 = vmatprep.subr.mxu0 0.0
        %863 = vmatpush1.msra.mxu0 0.0
        %864 = vmatprep.subr.mxu0 0.0
        %865 = vmatpush1.msra.mxu0 0.0
        %866 = vmatprep.subr.mxu0 0.0
        %867 = vmatpush1.msra.mxu0 0.0
        %868 = vmatprep.subr.mxu0 0.0
        %869 = vmatpush1.msra.mxu0 0.0
        %870 = vmatprep.subr.mxu0 0.0
        %871 = vmatpush1.msra.mxu0 0.0
        %872 = vmatprep.subr.mxu0 0.0
        %873 = vmatpush1.msra.mxu0 0.0
        %874 = vmatprep.subr.mxu0 0.0
        %875 = vmatpush1.msra.mxu0 0.0
        %876 = vmatprep.subr.mxu0 0.0
        %877 = vmatpush1.msra.mxu0 0.0
        %878 = vmatprep.subr.mxu0 0.0
        %879 = vmatpush1.msra.mxu0 0.0
        %880 = vmatprep.subr.mxu0 0.0
        %881 = vmatpush1.msra.mxu0 0.0
        %882 = vmatprep.subr.mxu0 0.0
        %883 = vmatpush1.msra.mxu0 0.0
        %884 = vmatprep.subr.mxu0 0.0
        %885 = vmatpush1.msra.mxu0 0.0
        %886 = vmatprep.mubr.f32.mxu0 0.0
        %887 = vmatmul.mubr.f32.gmra.mrb[0].mxu0 %v820
        %v888 = vpop.f32.mrb[0].mxu0
        %v889 = vadd.f32 %v817, %v888
        %v890 = vpop.f32.mrb[0].mxu0
        %891 = vdwg.mxu0
        %v892 = vld [vmem:[%s9] sm:$0xff]
        %v893 = vld [vmem:[%s9 + $0x8] sm:$0xff]
        %v894 = vld [vmem:[%s9 + $0x10] sm:$0xff]
        %v895 = vld [vmem:[%s9 + $0x18] sm:$0xff]
        %v896 = vld [vmem:[%s10] sm:$0x1]
        %v898 = vlaneseq
        %v899 = vshrl.u32 %v898, 7
        %v900 = vsub.s32 0, %v899
        %v901 = vrot.slane %v896, %v900
        %v904 = vsel %vm734, %v722, 0
        %906 = vmatprep.subr.mxu0 0.0
        %907 = vmatpush1.msra.mxu0 %v892
        %908 = vmatprep.subr.mxu0 0.0
        %909 = vmatpush1.msra.mxu0 %v893
        %910 = vmatprep.subr.mxu0 0.0
        %911 = vmatpush1.msra.mxu0 %v894
        %912 = vmatprep.subr.mxu0 0.0
        %913 = vmatpush1.msra.mxu0 %v895
        %914 = vmatprep.subr.mxu0 0.0
        %915 = vmatpush1.msra.mxu0 0.0
        %916 = vmatprep.subr.mxu0 0.0
        %917 = vmatpush1.msra.mxu0 0.0
        %918 = vmatprep.subr.mxu0 0.0
        %919 = vmatpush1.msra.mxu0 0.0
        %920 = vmatprep.subr.mxu0 0.0
        %921 = vmatpush1.msra.mxu0 0.0
        %922 = vmatprep.subr.mxu0 0.0
        %923 = vmatpush1.msra.mxu0 0.0
        %924 = vmatprep.subr.mxu0 0.0
        %925 = vmatpush1.msra.mxu0 0.0
        %926 = vmatprep.subr.mxu0 0.0
        %927 = vmatpush1.msra.mxu0 0.0
        %928 = vmatprep.subr.mxu0 0.0
        %929 = vmatpush1.msra.mxu0 0.0
        %930 = vmatprep.subr.mxu0 0.0
        %931 = vmatpush1.msra.mxu0 0.0
        %932 = vmatprep.subr.mxu0 0.0
        %933 = vmatpush1.msra.mxu0 0.0
        %934 = vmatprep.subr.mxu0 0.0
        %935 = vmatpush1.msra.mxu0 0.0
        %936 = vmatprep.subr.mxu0 0.0
        %937 = vmatpush1.msra.mxu0 0.0
        %938 = vmatprep.subr.mxu0 0.0
        %939 = vmatpush1.msra.mxu0 0.0
        %940 = vmatprep.subr.mxu0 0.0
        %941 = vmatpush1.msra.mxu0 0.0
        %942 = vmatprep.subr.mxu0 0.0
        %943 = vmatpush1.msra.mxu0 0.0
        %944 = vmatprep.subr.mxu0 0.0
        %945 = vmatpush1.msra.mxu0 0.0
        %946 = vmatprep.subr.mxu0 0.0
        %947 = vmatpush1.msra.mxu0 0.0
        %948 = vmatprep.subr.mxu0 0.0
        %949 = vmatpush1.msra.mxu0 0.0
        %950 = vmatprep.subr.mxu0 0.0
        %951 = vmatpush1.msra.mxu0 0.0
        %952 = vmatprep.subr.mxu0 0.0
        %953 = vmatpush1.msra.mxu0 0.0
        %954 = vmatprep.subr.mxu0 0.0
        %955 = vmatpush1.msra.mxu0 0.0
        %956 = vmatprep.subr.mxu0 0.0
        %957 = vmatpush1.msra.mxu0 0.0
        %958 = vmatprep.subr.mxu0 0.0
        %959 = vmatpush1.msra.mxu0 0.0
        %960 = vmatprep.subr.mxu0 0.0
        %961 = vmatpush1.msra.mxu0 0.0
        %962 = vmatprep.subr.mxu0 0.0
        %963 = vmatpush1.msra.mxu0 0.0
        %964 = vmatprep.subr.mxu0 0.0
        %965 = vmatpush1.msra.mxu0 0.0
        %966 = vmatprep.subr.mxu0 0.0
        %967 = vmatpush1.msra.mxu0 0.0
        %968 = vmatprep.subr.mxu0 0.0
        %969 = vmatpush1.msra.mxu0 0.0
        %970 = vmatprep.mubr.f32.mxu0 0.0
        %971 = vmatmul.mubr.f32.gmra.mrb[0].mxu0 %v904
        %v972 = vpop.f32.mrb[0].mxu0
        %v973 = vadd.f32 %v901, %v972
        %v974 = vpop.f32.mrb[0].mxu0
        %975 = vdwg.mxu0
        %v976 = vld [vmem:[#allocation14] sm:$0xff]
        %v977 = vld [vmem:[#allocation14 + $0x8] sm:$0xff]
        %v978 = vld [vmem:[#allocation14 + $0x10] sm:$0xff]
        %v979 = vld [vmem:[#allocation14 + $0x18] sm:$0xff]
        %vm980 = vcmask 130048
        %v982 = vsel %vm980, %v805, 0
        %v985 = vsel %vm980, %v889, 0
        %987 = vmatprep.subr.mxu0 0.0
        %988 = vmatpush1.xpose.msra.mxu0 %v985
        %989 = vmatprep.subr.mxu0 0.0
        %990 = vmatpush1.xpose.msra.mxu0 0.0
        %991 = vmatprep.subr.mxu0 0.0
        %992 = vmatpush1.xpose.msra.mxu0 0.0
        %993 = vmatprep.subr.mxu0 0.0
        %994 = vmatpush1.xpose.msra.mxu0 0.0
        %995 = vmatprep.subr.mxu0 0.0
        %996 = vmatpush1.xpose.msra.mxu0 0.0
        %997 = vmatprep.subr.mxu0 0.0
        %998 = vmatpush1.xpose.msra.mxu0 0.0
        %999 = vmatprep.subr.mxu0 0.0
        %1000 = vmatpush1.xpose.msra.mxu0 0.0
        %1001 = vmatprep.subr.mxu0 0.0
        %1002 = vmatpush1.xpose.msra.mxu0 0.0
        %1003 = vmatprep.subr.mxu0 0.0
        %1004 = vmatpush1.xpose.msra.mxu0 0.0
        %1005 = vmatprep.subr.mxu0 0.0
        %1006 = vmatpush1.xpose.msra.mxu0 0.0
        %1007 = vmatprep.subr.mxu0 0.0
        %1008 = vmatpush1.xpose.msra.mxu0 0.0
        %1009 = vmatprep.subr.mxu0 0.0
        %1010 = vmatpush1.xpose.msra.mxu0 0.0
        %1011 = vmatprep.subr.mxu0 0.0
        %1012 = vmatpush1.xpose.msra.mxu0 0.0
        %1013 = vmatprep.subr.mxu0 0.0
        %1014 = vmatpush1.xpose.msra.mxu0 0.0
        %1015 = vmatprep.subr.mxu0 0.0
        %1016 = vmatpush1.xpose.msra.mxu0 0.0
        %1017 = vmatprep.subr.mxu0 0.0
        %1018 = vmatpush1.xpose.msra.mxu0 0.0
        %1019 = vmatprep.subr.mxu0 0.0
        %1020 = vmatpush1.xpose.msra.mxu0 0.0
        %1021 = vmatprep.subr.mxu0 0.0
        %1022 = vmatpush1.xpose.msra.mxu0 0.0
        %1023 = vmatprep.subr.mxu0 0.0
        %1024 = vmatpush1.xpose.msra.mxu0 0.0
        %1025 = vmatprep.subr.mxu0 0.0
        %1026 = vmatpush1.xpose.msra.mxu0 0.0
        %1027 = vmatprep.subr.mxu0 0.0
        %1028 = vmatpush1.xpose.msra.mxu0 0.0
        %1029 = vmatprep.subr.mxu0 0.0
        %1030 = vmatpush1.xpose.msra.mxu0 0.0
        %1031 = vmatprep.subr.mxu0 0.0
        %1032 = vmatpush1.xpose.msra.mxu0 0.0
        %1033 = vmatprep.subr.mxu0 0.0
        %1034 = vmatpush1.xpose.msra.mxu0 0.0
        %1035 = vmatprep.subr.mxu0 0.0
        %1036 = vmatpush1.xpose.msra.mxu0 0.0
        %1037 = vmatprep.subr.mxu0 0.0
        %1038 = vmatpush1.xpose.msra.mxu0 0.0
        %1039 = vmatprep.subr.mxu0 0.0
        %1040 = vmatpush1.xpose.msra.mxu0 0.0
        %1041 = vmatprep.subr.mxu0 0.0
        %1042 = vmatpush1.xpose.msra.mxu0 0.0
        %1043 = vmatprep.subr.mxu0 0.0
        %1044 = vmatpush1.xpose.msra.mxu0 0.0
        %1045 = vmatprep.subr.mxu0 0.0
        %1046 = vmatpush1.xpose.msra.mxu0 0.0
        %1047 = vmatprep.subr.mxu0 0.0
        %1048 = vmatpush1.xpose.msra.mxu0 0.0
        %1049 = vmatprep.subr.mxu0 0.0
        %1050 = vmatpush1.xpose.msra.mxu0 0.0
        %1051 = vmatprep.mubr.f32.mxu0 0.0
        %1052 = vmatmul.mubr.f32.gmra.mrb[0].mxu0 %v982
        %v1053 = vpop.f32.mrb[0].mxu0
        %v1054 = vadd.f32 0.0, %v1053
        %v1055 = vpop.f32.mrb[0].mxu0
        %1056 = vdwg.mxu0
        %v1057 = vmul.f32 %v1054, 0.25
        %vm1058 = vcmask 64512
        %v1059 = vsel %vm1058, %v1057, -inf
        %1060 = vmax.xlane.f32.xlu0 %v1059
        %v1061 = vpop.xlane.xlu0 %1060
        %v1062 = vsub.f32 %v1057, %v1061
        %v1063 = vmul.f32 %v1062, 1.442695
        %v1064 = vpow.pop %v1063
        %v1065 = vsel %vm1058, %v1064, 0.0
        %1066 = vadd.xlane.f32.xlu0 %v1065
        %v1067 = vpop.xlane.xlu0 %1066
        %v1068 = vrcp.pop %v1067
        %v1069 = vmul.f32 %v1064, %v1068
        %v1071 = vsel %vm1058, %v1069, 0
        %1073 = vmatprep.subr.mxu0 0.0
        %1074 = vmatpush1.msra.mxu0 %v973
        %1075 = vmatprep.subr.mxu0 0.0
        %1076 = vmatpush1.msra.mxu0 0.0
        %1077 = vmatprep.subr.mxu0 0.0
        %1078 = vmatpush1.msra.mxu0 0.0
        %1079 = vmatprep.subr.mxu0 0.0
        %1080 = vmatpush1.msra.mxu0 0.0
        %1081 = vmatprep.subr.mxu0 0.0
        %1082 = vmatpush1.msra.mxu0 0.0
        %1083 = vmatprep.subr.mxu0 0.0
        %1084 = vmatpush1.msra.mxu0 0.0
        %1085 = vmatprep.subr.mxu0 0.0
        %1086 = vmatpush1.msra.mxu0 0.0
        %1087 = vmatprep.subr.mxu0 0.0
        %1088 = vmatpush1.msra.mxu0 0.0
        %1089 = vmatprep.subr.mxu0 0.0
        %1090 = vmatpush1.msra.mxu0 0.0
        %1091 = vmatprep.subr.mxu0 0.0
        %1092 = vmatpush1.msra.mxu0 0.0
        %1093 = vmatprep.subr.mxu0 0.0
        %1094 = vmatpush1.msra.mxu0 0.0
        %1095 = vmatprep.subr.mxu0 0.0
        %1096 = vmatpush1.msra.mxu0 0.0
        %1097 = vmatprep.subr.mxu0 0.0
        %1098 = vmatpush1.msra.mxu0 0.0
        %1099 = vmatprep.subr.mxu0 0.0
        %1100 = vmatpush1.msra.mxu0 0.0
        %1101 = vmatprep.subr.mxu0 0.0
        %1102 = vmatpush1.msra.mxu0 0.0
        %1103 = vmatprep.subr.mxu0 0.0
        %1104 = vmatpush1.msra.mxu0 0.0
        %1105 = vmatprep.subr.mxu0 0.0
        %1106 = vmatpush1.msra.mxu0 0.0
        %1107 = vmatprep.subr.mxu0 0.0
        %1108 = vmatpush1.msra.mxu0 0.0
        %1109 = vmatprep.subr.mxu0 0.0
        %1110 = vmatpush1.msra.mxu0 0.0
        %1111 = vmatprep.subr.mxu0 0.0
        %1112 = vmatpush1.msra.mxu0 0.0
        %1113 = vmatprep.subr.mxu0 0.0
        %1114 = vmatpush1.msra.mxu0 0.0
        %1115 = vmatprep.subr.mxu0 0.0
        %1116 = vmatpush1.msra.mxu0 0.0
        %1117 = vmatprep.subr.mxu0 0.0
        %1118 = vmatpush1.msra.mxu0 0.0
        %1119 = vmatprep.subr.mxu0 0.0
        %1120 = vmatpush1.msra.mxu0 0.0
        %1121 = vmatprep.subr.mxu0 0.0
        %1122 = vmatpush1.msra.mxu0 0.0
        %1123 = vmatprep.subr.mxu0 0.0
        %1124 = vmatpush1.msra.mxu0 0.0
        %1125 = vmatprep.subr.mxu0 0.0
        %1126 = vmatpush1.msra.mxu0 0.0
        %1127 = vmatprep.subr.mxu0 0.0
        %1128 = vmatpush1.msra.mxu0 0.0
        %1129 = vmatprep.subr.mxu0 0.0
        %1130 = vmatpush1.msra.mxu0 0.0
        %1131 = vmatprep.subr.mxu0 0.0
        %1132 = vmatpush1.msra.mxu0 0.0
        %1133 = vmatprep.subr.mxu0 0.0
        %1134 = vmatpush1.msra.mxu0 0.0
        %1135 = vmatprep.subr.mxu0 0.0
        %1136 = vmatpush1.msra.mxu0 0.0
        %1137 = vmatprep.mubr.f32.mxu0 0.0
        %1138 = vmatmul.mubr.f32.gmra.mrb[0].mxu0 %v1071
        %v1139 = vpop.f32.mrb[0].mxu0
        %v1140 = vadd.f32 0.0, %v1139
        %v1141 = vpop.f32.mrb[0].mxu0
        %1142 = vdwg.mxu0
        %1143 = vrot.lane.b32.xlu0 %v805, 112
        %v1144 = vpop.permute.xlu0 %1143
        %1145 = vrot.lane.b32.xlu0 %v889, 112
        %v1146 = vpop.permute.xlu0 %1145
        %v1147 = vsel %vm980, %v1144, 0
        %v1149 = vsel %vm980, %v1146, 0
        %1151 = vmatprep.subr.mxu0 0.0
        %1152 = vmatpush1.xpose.msra.mxu0 %v1149
        %1153 = vmatprep.subr.mxu0 0.0
        %1154 = vmatpush1.xpose.msra.mxu0 0.0
        %1155 = vmatprep.subr.mxu0 0.0
        %1156 = vmatpush1.xpose.msra.mxu0 0.0
        %1157 = vmatprep.subr.mxu0 0.0
        %1158 = vmatpush1.xpose.msra.mxu0 0.0
        %1159 = vmatprep.subr.mxu0 0.0
        %1160 = vmatpush1.xpose.msra.mxu0 0.0
        %1161 = vmatprep.subr.mxu0 0.0
        %1162 = vmatpush1.xpose.msra.mxu0 0.0
        %1163 = vmatprep.subr.mxu0 0.0
        %1164 = vmatpush1.xpose.msra.mxu0 0.0
        %1165 = vmatprep.subr.mxu0 0.0
        %1166 = vmatpush1.xpose.msra.mxu0 0.0
        %1167 = vmatprep.subr.mxu0 0.0
        %1168 = vmatpush1.xpose.msra.mxu0 0.0
        %1169 = vmatprep.subr.mxu0 0.0
        %1170 = vmatpush1.xpose.msra.mxu0 0.0
        %1171 = vmatprep.subr.mxu0 0.0
        %1172 = vmatpush1.xpose.msra.mxu0 0.0
        %1173 = vmatprep.subr.mxu0 0.0
        %1174 = vmatpush1.xpose.msra.mxu0 0.0
        %1175 = vmatprep.subr.mxu0 0.0
        %1176 = vmatpush1.xpose.msra.mxu0 0.0
        %1177 = vmatprep.subr.mxu0 0.0
        %1178 = vmatpush1.xpose.msra.mxu0 0.0
        %1179 = vmatprep.subr.mxu0 0.0
        %1180 = vmatpush1.xpose.msra.mxu0 0.0
        %1181 = vmatprep.subr.mxu0 0.0
        %1182 = vmatpush1.xpose.msra.mxu0 0.0
        %1183 = vmatprep.subr.mxu0 0.0
        %1184 = vmatpush1.xpose.msra.mxu0 0.0
        %1185 = vmatprep.subr.mxu0 0.0
        %1186 = vmatpush1.xpose.msra.mxu0 0.0
        %1187 = vmatprep.subr.mxu0 0.0
        %1188 = vmatpush1.xpose.msra.mxu0 0.0
        %1189 = vmatprep.subr.mxu0 0.0
        %1190 = vmatpush1.xpose.msra.mxu0 0.0
        %1191 = vmatprep.subr.mxu0 0.0
        %1192 = vmatpush1.xpose.msra.mxu0 0.0
        %1193 = vmatprep.subr.mxu0 0.0
        %1194 = vmatpush1.xpose.msra.mxu0 0.0
        %1195 = vmatprep.subr.mxu0 0.0
        %1196 = vmatpush1.xpose.msra.mxu0 0.0
        %1197 = vmatprep.subr.mxu0 0.0
        %1198 = vmatpush1.xpose.msra.mxu0 0.0
        %1199 = vmatprep.subr.mxu0 0.0
        %1200 = vmatpush1.xpose.msra.mxu0 0.0
        %1201 = vmatprep.subr.mxu0 0.0
        %1202 = vmatpush1.xpose.msra.mxu0 0.0
        %1203 = vmatprep.subr.mxu0 0.0
        %1204 = vmatpush1.xpose.msra.mxu0 0.0
        %1205 = vmatprep.subr.mxu0 0.0
        %1206 = vmatpush1.xpose.msra.mxu0 0.0
        %1207 = vmatprep.subr.mxu0 0.0
        %1208 = vmatpush1.xpose.msra.mxu0 0.0
        %1209 = vmatprep.subr.mxu0 0.0
        %1210 = vmatpush1.xpose.msra.mxu0 0.0
        %1211 = vmatprep.subr.mxu0 0.0
        %1212 = vmatpush1.xpose.msra.mxu0 0.0
        %1213 = vmatprep.subr.mxu0 0.0
        %1214 = vmatpush1.xpose.msra.mxu0 0.0
        %1215 = vmatprep.mubr.f32.mxu0 0.0
        %1216 = vmatmul.mubr.f32.gmra.mrb[0].mxu0 %v1147
        %v1217 = vpop.f32.mrb[0].mxu0
        %v1218 = vadd.f32 0.0, %v1217
        %v1219 = vpop.f32.mrb[0].mxu0
        %1220 = vdwg.mxu0
        %v1221 = vmul.f32 %v1218, 0.25
        %v1222 = vsel %vm1058, %v1221, -inf
        %1223 = vmax.xlane.f32.xlu0 %v1222
        %v1224 = vpop.xlane.xlu0 %1223
        %v1225 = vsub.f32 %v1221, %v1224
        %v1226 = vmul.f32 %v1225, 1.442695
        %v1227 = vpow.pop %v1226
        %v1228 = vsel %vm1058, %v1227, 0.0
        %1229 = vadd.xlane.f32.xlu0 %v1228
        %v1230 = vpop.xlane.xlu0 %1229
        %v1231 = vrcp.pop %v1230
        %v1232 = vmul.f32 %v1227, %v1231
        %1234 = vrot.lane.b32.xlu0 %v973, 112
        %v1235 = vpop.permute.xlu0 %1234
        %v1238 = vsel %vm1058, %v1232, 0
        %1240 = vmatprep.subr.mxu0 0.0
        %1241 = vmatpush1.msra.mxu0 %v1235
        %1242 = vmatprep.subr.mxu0 0.0
        %1243 = vmatpush1.msra.mxu0 0.0
        %1244 = vmatprep.subr.mxu0 0.0
        %1245 = vmatpush1.msra.mxu0 0.0
        %1246 = vmatprep.subr.mxu0 0.0
        %1247 = vmatpush1.msra.mxu0 0.0
        %1248 = vmatprep.subr.mxu0 0.0
        %1249 = vmatpush1.msra.mxu0 0.0
        %1250 = vmatprep.subr.mxu0 0.0
        %1251 = vmatpush1.msra.mxu0 0.0
        %1252 = vmatprep.subr.mxu0 0.0
        %1253 = vmatpush1.msra.mxu0 0.0
        %1254 = vmatprep.subr.mxu0 0.0
        %1255 = vmatpush1.msra.mxu0 0.0
        %1256 = vmatprep.subr.mxu0 0.0
        %1257 = vmatpush1.msra.mxu0 0.0
        %1258 = vmatprep.subr.mxu0 0.0
        %1259 = vmatpush1.msra.mxu0 0.0
        %1260 = vmatprep.subr.mxu0 0.0
        %1261 = vmatpush1.msra.mxu0 0.0
        %1262 = vmatprep.subr.mxu0 0.0
        %1263 = vmatpush1.msra.mxu0 0.0
        %1264 = vmatprep.subr.mxu0 0.0
        %1265 = vmatpush1.msra.mxu0 0.0
        %1266 = vmatprep.subr.mxu0 0.0
        %1267 = vmatpush1.msra.mxu0 0.0
        %1268 = vmatprep.subr.mxu0 0.0
        %1269 = vmatpush1.msra.mxu0 0.0
        %1270 = vmatprep.subr.mxu0 0.0
        %1271 = vmatpush1.msra.mxu0 0.0
        %1272 = vmatprep.subr.mxu0 0.0
        %1273 = vmatpush1.msra.mxu0 0.0
        %1274 = vmatprep.subr.mxu0 0.0
        %1275 = vmatpush1.msra.mxu0 0.0
        %1276 = vmatprep.subr.mxu0 0.0
        %1277 = vmatpush1.msra.mxu0 0.0
        %1278 = vmatprep.subr.mxu0 0.0
        %1279 = vmatpush1.msra.mxu0 0.0
        %1280 = vmatprep.subr.mxu0 0.0
        %1281 = vmatpush1.msra.mxu0 0.0
        %1282 = vmatprep.subr.mxu0 0.0
        %1283 = vmatpush1.msra.mxu0 0.0
        %1284 = vmatprep.subr.mxu0 0.0
        %1285 = vmatpush1.msra.mxu0 0.0
        %1286 = vmatprep.subr.mxu0 0.0
        %1287 = vmatpush1.msra.mxu0 0.0
        %1288 = vmatprep.subr.mxu0 0.0
        %1289 = vmatpush1.msra.mxu0 0.0
        %1290 = vmatprep.subr.mxu0 0.0
        %1291 = vmatpush1.msra.mxu0 0.0
        %1292 = vmatprep.subr.mxu0 0.0
        %1293 = vmatpush1.msra.mxu0 0.0
        %1294 = vmatprep.subr.mxu0 0.0
        %1295 = vmatpush1.msra.mxu0 0.0
        %1296 = vmatprep.subr.mxu0 0.0
        %1297 = vmatpush1.msra.mxu0 0.0
        %1298 = vmatprep.subr.mxu0 0.0
        %1299 = vmatpush1.msra.mxu0 0.0
        %1300 = vmatprep.subr.mxu0 0.0
        %1301 = vmatpush1.msra.mxu0 0.0
        %1302 = vmatprep.subr.mxu0 0.0
        %1303 = vmatpush1.msra.mxu0 0.0
        %1304 = vmatprep.mubr.f32.mxu0 0.0
        %1305 = vmatmul.mubr.f32.gmra.mrb[0].mxu0 %v1238
        %v1306 = vpop.f32.mrb[0].mxu0
        %v1307 = vadd.f32 0.0, %v1306
        %v1308 = vpop.f32.mrb[0].mxu0
        %1309 = vdwg.mxu0
        %v1311 = vsel %vm980, %v1307, 0
        %1313 = vmatprep.subr.mxu0 0.0
        %1314 = vmatpush1.msra.mxu0 %v978
        %1315 = vmatprep.subr.mxu0 0.0
        %1316 = vmatpush1.msra.mxu0 %v979
        %1317 = vmatprep.subr.mxu0 0.0
        %1318 = vmatpush1.msra.mxu0 0.0
        %1319 = vmatprep.subr.mxu0 0.0
        %1320 = vmatpush1.msra.mxu0 0.0
        %1321 = vmatprep.subr.mxu0 0.0
        %1322 = vmatpush1.msra.mxu0 0.0
        %1323 = vmatprep.subr.mxu0 0.0
        %1324 = vmatpush1.msra.mxu0 0.0
        %1325 = vmatprep.subr.mxu0 0.0
        %1326 = vmatpush1.msra.mxu0 0.0
        %1327 = vmatprep.subr.mxu0 0.0
        %1328 = vmatpush1.msra.mxu0 0.0
        %1329 = vmatprep.subr.mxu0 0.0
        %1330 = vmatpush1.msra.mxu0 0.0
        %1331 = vmatprep.subr.mxu0 0.0
        %1332 = vmatpush1.msra.mxu0 0.0
        %1333 = vmatprep.subr.mxu0 0.0
        %1334 = vmatpush1.msra.mxu0 0.0
        %1335 = vmatprep.subr.mxu0 0.0
        %1336 = vmatpush1.msra.mxu0 0.0
        %1337 = vmatprep.subr.mxu0 0.0
        %1338 = vmatpush1.msra.mxu0 0.0
        %1339 = vmatprep.subr.mxu0 0.0
        %1340 = vmatpush1.msra.mxu0 0.0
        %1341 = vmatprep.subr.mxu0 0.0
        %1342 = vmatpush1.msra.mxu0 0.0
        %1343 = vmatprep.subr.mxu0 0.0
        %1344 = vmatpush1.msra.mxu0 0.0
        %1345 = vmatprep.subr.mxu0 0.0
        %1346 = vmatpush1.msra.mxu0 0.0
        %1347 = vmatprep.subr.mxu0 0.0
        %1348 = vmatpush1.msra.mxu0 0.0
        %1349 = vmatprep.subr.mxu0 0.0
        %1350 = vmatpush1.msra.mxu0 0.0
        %1351 = vmatprep.subr.mxu0 0.0
        %1352 = vmatpush1.msra.mxu0 0.0
        %1353 = vmatprep.subr.mxu0 0.0
        %1354 = vmatpush1.msra.mxu0 0.0
        %1355 = vmatprep.subr.mxu0 0.0
        %1356 = vmatpush1.msra.mxu0 0.0
        %1357 = vmatprep.subr.mxu0 0.0
        %1358 = vmatpush1.msra.mxu0 0.0
        %1359 = vmatprep.subr.mxu0 0.0
        %1360 = vmatpush1.msra.mxu0 0.0
        %1361 = vmatprep.subr.mxu0 0.0
        %1362 = vmatpush1.msra.mxu0 0.0
        %1363 = vmatprep.subr.mxu0 0.0
        %1364 = vmatpush1.msra.mxu0 0.0
        %1365 = vmatprep.subr.mxu0 0.0
        %1366 = vmatpush1.msra.mxu0 0.0
        %1367 = vmatprep.subr.mxu0 0.0
        %1368 = vmatpush1.msra.mxu0 0.0
        %1369 = vmatprep.subr.mxu0 0.0
        %1370 = vmatpush1.msra.mxu0 0.0
        %1371 = vmatprep.subr.mxu0 0.0
        %1372 = vmatpush1.msra.mxu0 0.0
        %1373 = vmatprep.subr.mxu0 0.0
        %1374 = vmatpush1.msra.mxu0 0.0
        %1375 = vmatprep.subr.mxu0 0.0
        %1376 = vmatpush1.msra.mxu0 0.0
        %1377 = vmatprep.mubr.f32.mxu0 0.0
        %1378 = vmatmul.mubr.f32.gmra.mrb[0].mxu0 %v1311
        %v1379 = vpop.f32.mrb[0].mxu0
        %v1380 = vadd.f32 0.0, %v1379
        %v1381 = vpop.f32.mrb[0].mxu0
        %1382 = vdwg.mxu0
        %v1384 = vsel %vm980, %v1140, 0
        %1386 = vmatprep.subr.mxu0 0.0
        %1387 = vmatpush1.msra.mxu0 %v976
        %1388 = vmatprep.subr.mxu0 0.0
        %1389 = vmatpush1.msra.mxu0 %v977
        %1390 = vmatprep.subr.mxu0 0.0
        %1391 = vmatpush1.msra.mxu0 0.0
        %1392 = vmatprep.subr.mxu0 0.0
        %1393 = vmatpush1.msra.mxu0 0.0
        %1394 = vmatprep.subr.mxu0 0.0
        %1395 = vmatpush1.msra.mxu0 0.0
        %1396 = vmatprep.subr.mxu0 0.0
        %1397 = vmatpush1.msra.mxu0 0.0
        %1398 = vmatprep.subr.mxu0 0.0
        %1399 = vmatpush1.msra.mxu0 0.0
        %1400 = vmatprep.subr.mxu0 0.0
        %1401 = vmatpush1.msra.mxu0 0.0
        %1402 = vmatprep.subr.mxu0 0.0
        %1403 = vmatpush1.msra.mxu0 0.0
        %1404 = vmatprep.subr.mxu0 0.0
        %1405 = vmatpush1.msra.mxu0 0.0
        %1406 = vmatprep.subr.mxu0 0.0
        %1407 = vmatpush1.msra.mxu0 0.0
        %1408 = vmatprep.subr.mxu0 0.0
        %1409 = vmatpush1.msra.mxu0 0.0
        %1410 = vmatprep.subr.mxu0 0.0
        %1411 = vmatpush1.msra.mxu0 0.0
        %1412 = vmatprep.subr.mxu0 0.0
        %1413 = vmatpush1.msra.mxu0 0.0
        %1414 = vmatprep.subr.mxu0 0.0
        %1415 = vmatpush1.msra.mxu0 0.0
        %1416 = vmatprep.subr.mxu0 0.0
        %1417 = vmatpush1.msra.mxu0 0.0
        %1418 = vmatprep.subr.mxu0 0.0
        %1419 = vmatpush1.msra.mxu0 0.0
        %1420 = vmatprep.subr.mxu0 0.0
        %1421 = vmatpush1.msra.mxu0 0.0
        %1422 = vmatprep.subr.mxu0 0.0
        %1423 = vmatpush1.msra.mxu0 0.0
        %1424 = vmatprep.subr.mxu0 0.0
        %1425 = vmatpush1.msra.mxu0 0.0
        %1426 = vmatprep.subr.mxu0 0.0
        %1427 = vmatpush1.msra.mxu0 0.0
        %1428 = vmatprep.subr.mxu0 0.0
        %1429 = vmatpush1.msra.mxu0 0.0
        %1430 = vmatprep.subr.mxu0 0.0
        %1431 = vmatpush1.msra.mxu0 0.0
        %1432 = vmatprep.subr.mxu0 0.0
        %1433 = vmatpush1.msra.mxu0 0.0
        %1434 = vmatprep.subr.mxu0 0.0
        %1435 = vmatpush1.msra.mxu0 0.0
        %1436 = vmatprep.subr.mxu0 0.0
        %1437 = vmatpush1.msra.mxu0 0.0
        %1438 = vmatprep.subr.mxu0 0.0
        %1439 = vmatpush1.msra.mxu0 0.0
        %1440 = vmatprep.subr.mxu0 0.0
        %1441 = vmatpush1.msra.mxu0 0.0
        %1442 = vmatprep.subr.mxu0 0.0
        %1443 = vmatpush1.msra.mxu0 0.0
        %1444 = vmatprep.subr.mxu0 0.0
        %1445 = vmatpush1.msra.mxu0 0.0
        %1446 = vmatprep.subr.mxu0 0.0
        %1447 = vmatpush1.msra.mxu0 0.0
        %1448 = vmatprep.subr.mxu0 0.0
        %1449 = vmatpush1.msra.mxu0 0.0
        %1450 = vmatprep.mubr.f32.mxu0 0.0
        %1451 = vmatmul.mubr.f32.gmra.mrb[0].mxu0 %v1384
        %v1452 = vpop.f32.mrb[0].mxu0
        %v1453 = vadd.f32 %v1380, %v1452
        %v1454 = vpop.f32.mrb[0].mxu0
        %1455 = vdwg.mxu0
        %v1456 = vld [vmem:[%s12] sm:$0x1]
        %v1458 = vlaneseq
        %v1459 = vshrl.u32 %v1458, 7
        %v1460 = vsub.s32 0, %v1459
        %v1461 = vrot.slane %v1456, %v1460
        %v1463 = vadd.f32 %v1453, %v1461
        %v1464 = vsel %vm734, %v1463, 0.0
        %1465 = vadd.xlane.f32.xlu0 %v1464
        %v1466 = vpop.xlane.xlu0 %1465
        %v1467 = vrcp.pop 32.0
        %v1468 = vmul.f32 %v1466, %v1467
        %v1469 = vsub.f32 %v1463, %v1468
        %v1470 = vmul.f32 %v1469, %v1469
        %v1471 = vsel %vm734, %v1470, 0.0
        %1472 = vadd.xlane.f32.xlu0 %v1471
        %v1473 = vpop.xlane.xlu0 %1472
        %v1474 = vmul.f32 %v1473, %v1467
        %v1475 = vadd.f32 %v1474, 1e-05
        %v1476 = vrsqrt.pop %v1475
        %v1477 = vmul.f32 %v1469, %v1476
        %v1478 = vld [vmem:[%s13] sm:$0x1]
        %v1480 = vlaneseq
        %v1481 = vshrl.u32 %v1480, 7
        %v1482 = vsub.s32 0, %v1481
        %v1483 = vrot.slane %v1478, %v1482
        %v1485 = vmul.f32 %v1477, %v1483
        %v1486 = vld [vmem:[%s14] sm:$0x1]
        %v1488 = vlaneseq
        %v1489 = vshrl.u32 %v1488, 7
        %v1490 = vsub.s32 0, %v1489
        %v1491 = vrot.slane %v1486, %v1490
        %v1493 = vadd.f32 %v1485, %v1491
        %1494 = vst.msk [vmem:[%s715] sm:$0xff] %vm734, %v1493
        %s1495 = sand.u32 %s406, 1
        %s1496 = scalar_lea.sflag [#allocation4], %s1495
        %s1497 = sand.u32 %s406, 1
        %s1498 = smul.addr %s1497, 8
        %s1499 = scalar_lea.vmem [#allocation16], %s1498
        // Predicated region
        $region113: #{tpu_custom_call.1} parent=79 // pred_check
          %p1500 = pneg %p416
        $region114: #{tpu_custom_call.1} parent=79 // pred_check_branch
          %1502 = sbr.rel (%p1500) target = $region116
        $region115: #{tpu_custom_call.1} parent=79 // pred_region
          %s1504 = ssub.s32 128, 128
          %1505 = vsyncadd %s1496, %s1504
          %s1506 = sadd.s32 %s45, %s44
          %s1507 = smul.addr %s1506, 128
          %s1508 = scalar_lea.hbm %s15, %s1507
          %s1510 = sshll.u32 %s1499, 4
          %s1511 = int_to_ptr.vmem [resolvable:$true] %s1510
          %1513 = dma.vmem_to_hbm [thread:$0]  %s1511, 128, %s1508, %s1496
        $region116: #{tpu_custom_call.1} parent=79 // pred_fallthru
          _
      $region80: #{tpu_custom_call.1} parent=5 // pred_fallthru
        _
      %p1514 = scmp.le.s32.totalorder 2, %s35
      // Predicated region
      $region117: #{tpu_custom_call.1} parent=5 // pred_check
        %p1515 = pneg %p1514
      $region118: #{tpu_custom_call.1} parent=5 // pred_check_branch
        %1517 = sbr.rel (%p1515) target = $region120
      $region119: #{tpu_custom_call.1} parent=5 // pred_region
        %s1518 = ssub.s32 %s35, 2
        // Predicated region
        $region121: #{tpu_custom_call.1} parent=119 // pred_check
          %p1519 = pneg %p422
        $region122: #{tpu_custom_call.1} parent=119 // pred_check_branch
          %1521 = sbr.rel (%p1519) target = $region124
        $region123: #{tpu_custom_call.1} parent=119 // pred_region
          %s1522 = sand.u32 %s407, 1
          %s1523 = scalar_lea.sflag [#allocation4], %s1522
          %s1524 = sand.u32 %s407, 1
          %s1525 = smul.addr %s1524, 8
          %s1526 = scalar_lea.vmem [#allocation16], %s1525
          %1527 = dma.done %s1523, 128
        $region124: #{tpu_custom_call.1} parent=119 // pred_fallthru
          _
      $region120: #{tpu_custom_call.1} parent=5 // pred_fallthru
        _
    $region6: #{tpu_custom_call.1} parent=1 // loop_footer
      %s39 = sadd.s32 1, %s35
    $region7: #{tpu_custom_call.1} parent=1 // loop_footer_branch
      %34 = sbr.rel target = $region3
    $region8: #{tpu_custom_call.1} parent=1 // loop_exit
      _
    %1528 = vsyncpa [#allocation3], 1
    %s1529 = scalar_lea.sflag [#allocation3], 1
    %1530 = vsyncpa %s1529, 1
    %1531 = vsyncpa [#allocation6], 1
    %s1532 = scalar_lea.sflag [#allocation6], 1
    %1533 = vsyncpa %s1532, 1
    %1534 = vsyncpa [#allocation9], 1
    %s1535 = scalar_lea.sflag [#allocation9], 1
    %1536 = vsyncpa %s1535, 1
    %1537 = vsyncpa [#allocation12], 1
    %1538 = vsyncpa [#allocation15], 1
    %1539 = vsyncpa [#allocation4], 1
    %s1540 = scalar_lea.sflag [#allocation4], 1
    %1541 = vsyncpa %s1540, 1

</llo_original>
